<compile_context>
chip_gen: v6e
topology: v6e:2x2x1
jax: 0.10.0
libtpu: 0.0.40
codegen_flags: <defaults>
</compile_context>

<pallas_src>
import math
import jax
import jax.numpy as jnp
from jax.experimental import pallas as pl
from jax.experimental.pallas import tpu as pltpu

# ----- module config (small, synthetic) -----
C_S = 32          # node feature dim
C_P = 64          # edge embedding dim
FEAT_DIM = 32     # must be even (sin/cos halves)
NUM_BINS = 8
EMBED_DIFFUSE_MASK = True
EMBED_CHAIN = False  # TODO(synk): chain embedding branch not exercised (embed_chain=False)
MAX_LEN = 2056
LN_EPS = 1e-5

B = 2
N = 16

TOTAL_EDGE_FEATS = FEAT_DIM * 3 + NUM_BINS * 2 + (2 if EMBED_DIFFUSE_MASK else 0)  # 114
REST_DIM = 2 * NUM_BINS + 2           # [dist | sc | diffuse-cross]
SLAB_W = 128                          # lane-dense slab width: [mask | feats | 0-pad]
MASK_COL = 0
PAD_COLS = SLAB_W - 1 - TOTAL_EDGE_FEATS  # 13
MATMUL_DTYPE = jnp.bfloat16           # MXU operands only; accumulation/elementwise in f32


# --------------------------------------------------------------------------
# Pallas kernel: fused 3-layer MLP (relpos pre-folded) + LayerNorm + mask
# --------------------------------------------------------------------------
def edge_kernel(x_ref, w1_ref, w2_ref, w3_ref, c_ref, out_ref):
    x = x_ref[...]                                    # [R, 128] bf16 packed slab

    b1 = c_ref[0:1, :]
    b2 = c_ref[1:2, :]
    b3 = c_ref[2:3, :]
    gamma = c_ref[3:4, :]
    beta = c_ref[4:5, :]

    # layer 1: single K=128 MXU matmul (linear_relpos already folded into W1/b1)
    h = jnp.dot(x, w1_ref[...], preferred_element_type=jnp.float32) + b1
    h = jnp.maximum(h, 0.0)
    h = jnp.dot(h, w2_ref[...], preferred_element_type=jnp.float32) + b2
    h = jnp.maximum(h, 0.0)
    h = jnp.dot(h, w3_ref[...], preferred_element_type=jnp.float32) + b3

    # LayerNorm (biased variance, eps inside sqrt — matches nn.LayerNorm)
    mu = jnp.mean(h, axis=-1, keepdims=True)
    var = jnp.mean((h - mu) ** 2, axis=-1, keepdims=True)
    h = (h - mu) * jax.lax.rsqrt(var + LN_EPS)
    h = h * gamma + beta

    # pair mask lives in lane 0 of the slab (0/1 values are exact in bf16)
    mask = x[:, MASK_COL:MASK_COL + 1].astype(jnp.float32)
    out_ref[...] = h * mask


# --------------------------------------------------------------------------
# JAX glue: feature construction (cross concat, index embedding, distograms)
# --------------------------------------------------------------------------
# TODO(synk): at realistic N (>=128) build cross/pos_emb in-kernel from p_i +
# broadcasted_iota (EUP sin/cos) instead of round-tripping the N^2 broadcast
# through HBM; at B=2,N=16 the packed slab is <256 KB so wrapper build is fine.
def _sin_cos_pos_emb(d):
    f = FEAT_DIM
    k = jnp.arange(f // 2, dtype=jnp.float32)
    inv_freq = math.pi / (MAX_LEN ** (2.0 * k / f))
    ang = d[..., None] * inv_freq
    return jnp.concatenate([jnp.sin(ang), jnp.cos(ang)], axis=-1)


def _distogram(pos, min_bin=1e-3, max_bin=20.0, num_bins=NUM_BINS):
    d2 = jnp.linalg.norm(pos[:, :, None, :] - pos[:, None, :, :], axis=-1)[..., None]
    lower = jnp.linspace(min_bin, max_bin, num_bins)
    upper = jnp.concatenate([lower[1:], jnp.array([1e8], dtype=lower.dtype)])
    return ((d2 > lower) & (d2 < upper)).astype(jnp.float32)


def _build_edge_inputs(params, s, t, sc_t, diffuse_mask):
    b, n, _ = s.shape
    f = FEAT_DIM
    # linear_s_p (glue-scale matmul over nodes, not edges)
    p_i = s @ params["w_sp"] + params["b_sp"]                       # [B,N,f]
    cross = jnp.concatenate(
        [jnp.broadcast_to(p_i[:, :, None, :], (b, n, n, f)),
         jnp.broadcast_to(p_i[:, None, :, :], (b, n, n, f))], axis=-1)  # [B,N,N,2f]

    r = jnp.arange(n, dtype=jnp.float32)
    d = jnp.broadcast_to(r[None, :, None] - r[None, None, :], (b, n, n))
    pos_emb = _sin_cos_pos_emb(d)                                   # [B,N,N,f]

    dist_feats = _distogram(t)                                      # [B,N,N,nb]
    sc_feats = _distogram(sc_t)                                     # [B,N,N,nb]
    diff = jnp.concatenate(
        [jnp.broadcast_to(diffuse_mask[:, :, None, None], (b, n, n, 1)),
         jnp.broadcast_to(diffuse_mask[:, None, :, None], (b, n, n, 1))], axis=-1)
    rest = jnp.concatenate([dist_feats, sc_feats, diff], axis=-1)   # [B,N,N,2nb+2]
    return cross, pos_emb, rest


def _fold_and_pack_params(params):
    # Fold linear_relpos into layer 1:
    #   (pos @ w_r + b_r) @ w1b  ==  pos @ (w_r @ w1b) + (b_r @ w1b)
    w1b_folded = params["w_r"] @ params["w1b"]                       # (f, c_p)
    b1_folded = params["b1"] + params["b_r"] @ params["w1b"]         # (1, c_p)

    # Stack W1 to match the [mask | cross | pos | rest | pad] slab columns.
    w1_packed = jnp.concatenate(
        [jnp.zeros((1, C_P), jnp.float32),          # mask column: no contribution
         params["w1a"], w1b_folded, params["w1c"],
         jnp.zeros((PAD_COLS, C_P), jnp.float32)], axis=0).astype(MATMUL_DTYPE)

    # Merge all small per-feature constants into one (8, c_p) array.
    consts = jnp.zeros((8, C_P), jnp.float32)
    consts = consts.at[0].set(b1_folded[0])
    consts = consts.at[1].set(params["b2"][0])
    consts = consts.at[2].set(params["b3"][0])
    consts = consts.at[3].set(params["gamma"][0])
    consts = consts.at[4].set(params["beta"][0])
    return (w1_packed,
            params["w2"].astype(jnp.float32),
            params["w3"].astype(jnp.float32),
            consts)


def _num_parallel_tiles():
    """One tile per TensorCore: 1 step on 1-TC chips (v5e/v6e), 2 parallel on 2-TC."""
    try:
        kind = jax.devices()[0].device_kind.lower()
    except Exception:
        return 2
    if ("v5 lite" in kind) or ("v5e" in kind) or ("v6" in kind):
        return 1
    return 2


def edge_feature_net(params, s, t, sc_t, p_mask, diffuse_mask):
    b, n, _ = s.shape
    rows = b * n * n
    cross, pos_emb, rest = _build_edge_inputs(params, s, t, sc_t, diffuse_mask)

    # One lane-dense slab per edge row: [mask | cross | pos | rest | 0-pad]  (width 128)
    slab = jnp.concatenate(
        [p_mask.reshape(rows, 1).astype(jnp.float32),
         cross.reshape(rows, 2 * FEAT_DIM),
         pos_emb.reshape(rows, FEAT_DIM),
         rest.reshape(rows, REST_DIM),
         jnp.zeros((rows, PAD_COLS), jnp.float32)],
        axis=-1).astype(MATMUL_DTYPE)

    w1p, w2, w3, consts = _fold_and_pack_params(params)

    n_tiles = _num_parallel_tiles()
    if rows % n_tiles != 0:
        n_tiles = 1
    tile_r = rows // n_tiles
    assert tile_r % 8 == 0

    flops = 2 * rows * C_P * (SLAB_W + 2 * C_P)
    bytes_accessed = (rows * SLAB_W * 2            # bf16 slab in
                      + SLAB_W * C_P * 2           # bf16 W1
                      + 2 * C_P * C_P * 4          # f32 W2, W3
                      + 8 * C_P * 4                # f32 constants
                      + rows * C_P * 4)            # f32 output

    grid_spec = pltpu.PrefetchScalarGridSpec(
        num_scalar_prefetch=0,
        grid=(n_tiles,),
        in_specs=[pl.BlockSpec((tile_r, SLAB_W), lambda i: (i, 0)),
                  pl.BlockSpec(w1p.shape, lambda i: (0, 0)),
                  pl.BlockSpec(w2.shape, lambda i: (0, 0)),
                  pl.BlockSpec(w3.shape, lambda i: (0, 0)),
                  pl.BlockSpec(consts.shape, lambda i: (0, 0))],
        out_specs=pl.BlockSpec((tile_r, C_P), lambda i: (i, 0)),
    )

    out = pl.pallas_call(
        edge_kernel,
        out_shape=jax.ShapeDtypeStruct((rows, C_P), jnp.float32),
        grid_spec=grid_spec,
        compiler_params=pltpu.CompilerParams(dimension_semantics=("parallel",)),
        cost_estimate=pl.CostEstimate(flops=flops, transcendentals=rows,
                                      bytes_accessed=bytes_accessed),
    )(slab, w1p, w2, w3, consts)

    return out.reshape(b, n, n, C_P)


# --------------------------------------------------------------------------
# Pure-JAX reference (mirrors the PyTorch forward exactly, un-folded weights)
# --------------------------------------------------------------------------
def edge_feature_net_ref(params, s, t, sc_t, p_mask, diffuse_mask):
    cross, pos_emb, rest = _build_edge_inputs(params, s, t, sc_t, diffuse_mask)
    relpos = pos_emb @ params["w_r"] + params["b_r"]
    x = jnp.concatenate([cross, relpos, rest], axis=-1)
    w1 = jnp.concatenate([params["w1a"], params["w1b"], params["w1c"]], axis=0)
    h = jnp.maximum(x @ w1 + params["b1"], 0.0)
    h = jnp.maximum(h @ params["w2"] + params["b2"], 0.0)
    h = h @ params["w3"] + params["b3"]
    mu = jnp.mean(h, axis=-1, keepdims=True)
    var = jnp.mean((h - mu) ** 2, axis=-1, keepdims=True)
    h = (h - mu) / jnp.sqrt(var + LN_EPS) * params["gamma"] + params["beta"]
    return h * p_mask[..., None]


# --------------------------------------------------------------------------
# Deterministic parameter init (PyTorch-Linear-like uniform fan-in scaling)
# --------------------------------------------------------------------------
def init_params(key):
    def linear(k, fan_in, fan_out):
        k1, k2 = jax.random.split(k)
        bound = 1.0 / math.sqrt(fan_in)
        w = jax.random.uniform(k1, (fan_in, fan_out), jnp.float32, -bound, bound)
        b = jax.random.uniform(k2, (1, fan_out), jnp.float32, -bound, bound)
        return w, b

    keys = jax.random.split(key, 5)
    w_sp, b_sp = linear(keys[0], C_S, FEAT_DIM)
    w_r, b_r = linear(keys[1], FEAT_DIM, FEAT_DIM)
    w1, b1 = linear(keys[2], TOTAL_EDGE_FEATS, C_P)
    w2, b2 = linear(keys[3], C_P, C_P)
    w3, b3 = linear(keys[4], C_P, C_P)

    f = FEAT_DIM
    return dict(
        w_sp=w_sp, b_sp=b_sp,
        w_r=w_r, b_r=b_r,
        w1a=w1[: 2 * f], w1b=w1[2 * f: 3 * f], w1c=w1[3 * f:], b1=b1,
        w2=w2, b2=b2, w3=w3, b3=b3,
        gamma=jnp.ones((1, C_P), jnp.float32),
        beta=jnp.zeros((1, C_P), jnp.float32),
    )


if __name__ == "__main__":
    key = jax.random.PRNGKey(0)
    k_par, k_s, k_t, k_sc, k_pm, k_dm = jax.random.split(key, 6)

    params = init_params(k_par)

    s = jax.random.normal(k_s, (B, N, C_S), jnp.float32)
    t = 5.0 * jax.random.normal(k_t, (B, N, 3), jnp.float32)
    sc_t = 5.0 * jax.random.normal(k_sc, (B, N, 3), jnp.float32)
    p_mask = (jax.random.uniform(k_pm, (B, N, N)) > 0.3).astype(jnp.float32)
    diffuse_mask = (jax.random.uniform(k_dm, (B, N)) > 0.5).astype(jnp.float32)

    out = edge_feature_net(params, s, t, sc_t, p_mask, diffuse_mask)
    out = jax.block_until_ready(out)

    ref = jax.block_until_ready(
        edge_feature_net_ref(params, s, t, sc_t, p_mask, diffuse_mask))

    assert out.shape == (B, N, N, C_P), out.shape
    assert jnp.allclose(out, ref, atol=1e-2, rtol=1e-2), float(jnp.max(jnp.abs(out - ref)))

    print("KERNEL_OK")
</pallas_src>

<mosaic_0001>
module attributes {stable_mosaic.version = 11 : i64} {
  func.func @edge_kernel(%arg0: i32, %arg1: memref<256x128xbf16, #tpu.memory_space<vmem>>, %arg2: memref<128x64xbf16, #tpu.memory_space<vmem>>, %arg3: memref<64x64xf32, #tpu.memory_space<vmem>>, %arg4: memref<64x64xf32, #tpu.memory_space<vmem>>, %arg5: memref<8x64xf32, #tpu.memory_space<vmem>>, %arg6: memref<256x64xf32, #tpu.memory_space<vmem>>) attributes {dimension_semantics = [#tpu.dimension_semantics<parallel>], iteration_bounds = array<i64: 2>, scalar_prefetch = 0 : i64, scratch_operands = 0 : i64, tpu.core_type = #tpu.core_type<tc>, window_params = [{transform_indices = @transform_0, window_bounds = array<i64: 256, 128>}, {pipeline_mode = #tpu.pipeline_mode<synchronous>, transform_indices = @transform_1, window_bounds = array<i64: 128, 64>}, {pipeline_mode = #tpu.pipeline_mode<synchronous>, transform_indices = @transform_2, window_bounds = array<i64: 64, 64>}, {pipeline_mode = #tpu.pipeline_mode<synchronous>, transform_indices = @transform_3, window_bounds = array<i64: 64, 64>}, {pipeline_mode = #tpu.pipeline_mode<synchronous>, transform_indices = @transform_4, window_bounds = array<i64: 8, 64>}, {transform_indices = @transform_5, window_bounds = array<i64: 256, 64>}]} {
    %c0 = arith.constant 0 : index
    %c0_0 = arith.constant 0 : index
    %0 = vector.load %arg1[%c0, %c0_0] : memref<256x128xbf16, #tpu.memory_space<vmem>>, vector<256x128xbf16>
    %c0_1 = arith.constant 0 : index
    %c0_2 = arith.constant 0 : index
    %1 = vector.load %arg5[%c0_1, %c0_2] : memref<8x64xf32, #tpu.memory_space<vmem>>, vector<1x64xf32>
    %c1 = arith.constant 1 : index
    %c0_3 = arith.constant 0 : index
    %2 = vector.load %arg5[%c1, %c0_3] : memref<8x64xf32, #tpu.memory_space<vmem>>, vector<1x64xf32>
    %c2 = arith.constant 2 : index
    %c0_4 = arith.constant 0 : index
    %3 = vector.load %arg5[%c2, %c0_4] : memref<8x64xf32, #tpu.memory_space<vmem>>, vector<1x64xf32>
    %c3 = arith.constant 3 : index
    %c0_5 = arith.constant 0 : index
    %4 = vector.load %arg5[%c3, %c0_5] : memref<8x64xf32, #tpu.memory_space<vmem>>, vector<1x64xf32>
    %c4 = arith.constant 4 : index
    %c0_6 = arith.constant 0 : index
    %5 = vector.load %arg5[%c4, %c0_6] : memref<8x64xf32, #tpu.memory_space<vmem>>, vector<1x64xf32>
    %c0_7 = arith.constant 0 : index
    %c0_8 = arith.constant 0 : index
    %6 = vector.load %arg2[%c0_7, %c0_8] : memref<128x64xbf16, #tpu.memory_space<vmem>>, vector<128x64xbf16>
    %cst = arith.constant dense<0.000000e+00> : vector<256x64xf32>
    %7 = tpu.matmul %0, %6, %cst {dimension_numbers = #tpu.dot_dimension_numbers<[1], [0], [0], [1], [0, 0, 1, 1], [], []>} : vector<256x128xbf16>, vector<128x64xbf16>, vector<256x64xf32> -> vector<256x64xf32>
    %8 = vector.broadcast %1 : vector<1x64xf32> to vector<256x64xf32>
    %9 = arith.addf %7, %8 : vector<256x64xf32>
    %cst_9 = arith.constant 0.000000e+00 : f32
    %10 = vector.broadcast %cst_9 : f32 to vector<256x64xf32>
    %11 = arith.maximumf %9, %10 : vector<256x64xf32>
    %c0_10 = arith.constant 0 : index
    %c0_11 = arith.constant 0 : index
    %12 = vector.load %arg3[%c0_10, %c0_11] : memref<64x64xf32, #tpu.memory_space<vmem>>, vector<64x64xf32>
    %cst_12 = arith.constant dense<0.000000e+00> : vector<256x64xf32>
    %13 = tpu.matmul %11, %12, %cst_12 {dimension_numbers = #tpu.dot_dimension_numbers<[1], [0], [0], [1], [0, 0, 1, 1], [], []>} : vector<256x64xf32>, vector<64x64xf32>, vector<256x64xf32> -> vector<256x64xf32>
    %14 = vector.broadcast %2 : vector<1x64xf32> to vector<256x64xf32>
    %15 = arith.addf %13, %14 : vector<256x64xf32>
    %cst_13 = arith.constant 0.000000e+00 : f32
    %16 = vector.broadcast %cst_13 : f32 to vector<256x64xf32>
    %17 = arith.maximumf %15, %16 : vector<256x64xf32>
    %c0_14 = arith.constant 0 : index
    %c0_15 = arith.constant 0 : index
    %18 = vector.load %arg4[%c0_14, %c0_15] : memref<64x64xf32, #tpu.memory_space<vmem>>, vector<64x64xf32>
    %cst_16 = arith.constant dense<0.000000e+00> : vector<256x64xf32>
    %19 = tpu.matmul %17, %18, %cst_16 {dimension_numbers = #tpu.dot_dimension_numbers<[1], [0], [0], [1], [0, 0, 1, 1], [], []>} : vector<256x64xf32>, vector<64x64xf32>, vector<256x64xf32> -> vector<256x64xf32>
    %20 = vector.broadcast %3 : vector<1x64xf32> to vector<256x64xf32>
    %21 = arith.addf %19, %20 : vector<256x64xf32>
    %cst_17 = arith.constant dense<0.000000e+00> : vector<256xf32>
    %22 = vector.multi_reduction <add>, %21, %cst_17 [1] : vector<256x64xf32> to vector<256xf32>
    %23 = vector.shape_cast %22 : vector<256xf32> to vector<256x1xf32>
    %cst_18 = arith.constant 6.400000e+01 : f32
    %24 = vector.broadcast %cst_18 : f32 to vector<256x1xf32>
    %25 = arith.divf %23, %24 : vector<256x1xf32>
    %26 = vector.broadcast %25 : vector<256x1xf32> to vector<256x64xf32>
    %27 = arith.subf %21, %26 : vector<256x64xf32>
    %28 = arith.mulf %27, %27 : vector<256x64xf32>
    %cst_19 = arith.constant dense<0.000000e+00> : vector<256xf32>
    %29 = vector.multi_reduction <add>, %28, %cst_19 [1] : vector<256x64xf32> to vector<256xf32>
    %30 = vector.shape_cast %29 : vector<256xf32> to vector<256x1xf32>
    %cst_20 = arith.constant 6.400000e+01 : f32
    %31 = vector.broadcast %cst_20 : f32 to vector<256x1xf32>
    %32 = arith.divf %30, %31 : vector<256x1xf32>
    %33 = vector.broadcast %25 : vector<256x1xf32> to vector<256x64xf32>
    %34 = arith.subf %21, %33 : vector<256x64xf32>
    %cst_21 = arith.constant 9.99999974E-6 : f32
    %35 = vector.broadcast %cst_21 : f32 to vector<256x1xf32>
    %36 = arith.addf %32, %35 : vector<256x1xf32>
    %37 = math.rsqrt %36 : vector<256x1xf32>
    %38 = vector.broadcast %37 : vector<256x1xf32> to vector<256x64xf32>
    %39 = arith.mulf %34, %38 : vector<256x64xf32>
    %40 = vector.broadcast %4 : vector<1x64xf32> to vector<256x64xf32>
    %41 = arith.mulf %39, %40 : vector<256x64xf32>
    %42 = vector.broadcast %5 : vector<1x64xf32> to vector<256x64xf32>
    %43 = arith.addf %41, %42 : vector<256x64xf32>
    %44 = vector.extract_strided_slice %0 {offsets = [0, 0], sizes = [256, 1], strides = [1, 1]} : vector<256x128xbf16> to vector<256x1xbf16>
    %45 = arith.extf %44 : vector<256x1xbf16> to vector<256x1xf32>
    %46 = vector.broadcast %45 : vector<256x1xf32> to vector<256x64xf32>
    %47 = arith.mulf %43, %46 : vector<256x64xf32>
    %c0_22 = arith.constant 0 : index
    %c0_23 = arith.constant 0 : index
    %48 = vector.load %arg6[%c0_22, %c0_23] : memref<256x64xf32, #tpu.memory_space<vmem>>, vector<256x64xf32>
    tpu.vector_store %arg6[%c0_22, %c0_23], %47 {strides = array<i32>} : memref<256x64xf32, #tpu.memory_space<vmem>>, vector<256x64xf32>,
    return
  }
  func.func @transform_0(%arg0: i32) -> (i32, i32) {
    %c0_i32 = arith.constant 0 : i32
    %c0_i32_0 = arith.constant 0 : i32
    return %arg0, %c0_i32 : i32, i32
  }
  func.func @transform_1(%arg0: i32) -> (i32, i32) {
    %c0_i32 = arith.constant 0 : i32
    %c0_i32_0 = arith.constant 0 : i32
    %c0_i32_1 = arith.constant 0 : i32
    return %c0_i32, %c0_i32_0 : i32, i32
  }
  func.func @transform_2(%arg0: i32) -> (i32, i32) {
    %c0_i32 = arith.constant 0 : i32
    %c0_i32_0 = arith.constant 0 : i32
    %c0_i32_1 = arith.constant 0 : i32
    return %c0_i32, %c0_i32_0 : i32, i32
  }
  func.func @transform_3(%arg0: i32) -> (i32, i32) {
    %c0_i32 = arith.constant 0 : i32
    %c0_i32_0 = arith.constant 0 : i32
    %c0_i32_1 = arith.constant 0 : i32
    return %c0_i32, %c0_i32_0 : i32, i32
  }
  func.func @transform_4(%arg0: i32) -> (i32, i32) {
    %c0_i32 = arith.constant 0 : i32
    %c0_i32_0 = arith.constant 0 : i32
    %c0_i32_1 = arith.constant 0 : i32
    return %c0_i32, %c0_i32_0 : i32, i32
  }
  func.func @transform_5(%arg0: i32) -> (i32, i32) {
    %c0_i32 = arith.constant 0 : i32
    %c0_i32_0 = arith.constant 0 : i32
    return %arg0, %c0_i32 : i32, i32
  }
}

</mosaic_0001>

<llo_original>
// kernel: tpu_custom_call.1
$region0: #{tpu_custom_call.1}
  #allocation0 [shape = 'u32[]', space=smem, size = 0x4, offset = 0x4, fixed_abs, tag = 'smem constant byte address 0x4 - core index']
  #allocation1 [shape = 'u32[144,128]{1,0:T(1,128)}', space=vmem, size = 0x12000, scoped, tag = 'internal scratch']
  %s0 = inlined_call_operand.hbm [shape: bf16[512,128], index: 0, kind: input, shape index: {}]
  %s1 = inlined_call_operand.vmem [shape: bf16[128,64], index: 1, kind: input, shape index: {}]
  %s2 = inlined_call_operand.vmem [shape: f32[64,64], index: 2, kind: input, shape index: {}]
  %s3 = inlined_call_operand.hbm [shape: f32[64,64], index: 3, kind: input, shape index: {}]
  %s4 = inlined_call_operand.vmem [shape: f32[8,64], index: 4, kind: input, shape index: {}]
  %s5 = inlined_call_operand.vmem [shape: f32[512,64], index: 5, kind: output, shape index: {}]
  %s6 = sld [smem:[#allocation0]]
  $region61: #{tpu_custom_call.1} parent=0
    _
  %s8 = ssub.s32 1, %s6
  %s9 = scalar_select 0, %s8, %s6
  $region1: #{tpu_custom_call.1} parent=0
    #allocation2 [shape = 'u8[131072]{0}', space=vmem, size = 0x20000, scoped, tag = 'input window, operand 0']
    #allocation3 [shape = 's32[2]{0}', space=sflag, size = 0x8, scoped, tag = 'scoped memory for tpu_custom_call.1']
    #allocation4 [shape = 'u8[32768]{0}', space=vmem, size = 0x8000, scoped, tag = 'input window, operand 3, single buffered']
    #allocation5 [shape = 's32[1]{0}', space=sflag, size = 0x4, scoped, tag = 'scoped memory for tpu_custom_call.1']
    %10 = vsyncpa [#allocation3], 0
    %s11 = scalar_lea.sflag [#allocation3], 1
    %12 = vsyncpa %s11, 0
    %13 = vsyncpa [#allocation5], 0
    loop: start=0, step=1, limit=4
    $region2: #{tpu_custom_call.1} parent=1 // loop_pre_header
      _
    $region3: #{tpu_custom_call.1} parent=1 // loop_header
      %s15 = sphi 0, %s19
      %p16 = scmp.ge.s32.totalorder %s15, 4
      %s25 = sphi 0, %s27
      %s28 = sphi 0, %s25
      %s29 = sphi 0, %s28
      %s45 = sphi 0, %s29
      %s49 = sphi 0, %s49
      %s51 = sphi 0, %s49
      %s52 = sphi 0, %s51
      %s66 = sphi 0, %s52
      %s70 = sphi 0, %s70
      %s72 = sphi 0, %s70
      %s73 = sphi 0, %s72
      %s87 = sphi 0, %s73
      %s91 = sphi 0, %s91
      %s93 = sphi 0, %s91
      %s94 = sphi 0, %s93
      %s108 = sphi 0, %s94
      %s112 = sphi 0, %s112
      %s114 = sphi 0, %s112
      %s115 = sphi 0, %s114
      %s129 = sphi 0, %s115
      %s135 = sphi 0, %s137
      %s138 = sphi 0, %s135
      %s139 = sphi 0, %s138
      %s155 = sphi 0, %s139
    $region4: #{tpu_custom_call.1} parent=1 // loop_header_branch
      %18 = sbr.rel (%p16) target = $region8
    $region5: #{tpu_custom_call.1} parent=1 // loop_body
      %s20 = ssub.s32 %s15, 1
      %s21 = ssub.s32 %s15, 2
      %s22 = sadd.s32 %s15, 1
      %s23 = ssub.s32 %s15, %s22
      %p24 = scmp.eq.s32.totalorder %s23, 0
      %s26 = sadd.s32 %s25, 1
      %s27 = scalar_select %p24, %s25, %s26
      %p30 = pneg %p24
      %p31 = scmp.eq.s32.totalorder %s15, 1
      %p32 = por %p30, %p31
      %p33 = scmp.ne.s32.totalorder %s25, %s28
      %p34 = scmp.eq.s32.totalorder %s15, 0
      %p35 = por %p33, %p34
      %p36 = scmp.ne.s32.totalorder %s25, %s28
      %p37 = scmp.eq.s32.totalorder %s20, 1
      %p38 = por %p36, %p37
      %p39 = scmp.ne.s32.totalorder %s28, %s29
      %p40 = scmp.eq.s32.totalorder %s20, 0
      %p41 = por %p39, %p40
      %p42 = scmp.ne.s32.totalorder %s28, %s29
      %p43 = scmp.eq.s32.totalorder %s21, 1
      %p44 = por %p42, %p43
      %p46 = scmp.ne.s32.totalorder %s29, %s45
      %p47 = scmp.eq.s32.totalorder %s21, 0
      %p48 = por %p46, %p47
      %s50 = sadd.s32 %s49, 1
      %p53 = scmp.eq.s32.totalorder %s15, 1
      %p54 = scmp.ne.s32.totalorder %s49, %s51
      %p55 = scmp.eq.s32.totalorder %s15, 0
      %p56 = por %p54, %p55
      %p57 = scmp.ne.s32.totalorder %s49, %s51
      %p58 = scmp.eq.s32.totalorder %s20, 1
      %p59 = por %p57, %p58
      %p60 = scmp.ne.s32.totalorder %s51, %s52
      %p61 = scmp.eq.s32.totalorder %s20, 0
      %p62 = por %p60, %p61
      %p63 = scmp.ne.s32.totalorder %s51, %s52
      %p64 = scmp.eq.s32.totalorder %s21, 1
      %p65 = por %p63, %p64
      %p67 = scmp.ne.s32.totalorder %s52, %s66
      %p68 = scmp.eq.s32.totalorder %s21, 0
      %p69 = por %p67, %p68
      %s71 = sadd.s32 %s70, 1
      %p74 = scmp.eq.s32.totalorder %s15, 1
      %p75 = scmp.ne.s32.totalorder %s70, %s72
      %p76 = scmp.eq.s32.totalorder %s15, 0
      %p77 = por %p75, %p76
      %p78 = scmp.ne.s32.totalorder %s70, %s72
      %p79 = scmp.eq.s32.totalorder %s20, 1
      %p80 = por %p78, %p79
      %p81 = scmp.ne.s32.totalorder %s72, %s73
      %p82 = scmp.eq.s32.totalorder %s20, 0
      %p83 = por %p81, %p82
      %p84 = scmp.ne.s32.totalorder %s72, %s73
      %p85 = scmp.eq.s32.totalorder %s21, 1
      %p86 = por %p84, %p85
      %p88 = scmp.ne.s32.totalorder %s73, %s87
      %p89 = scmp.eq.s32.totalorder %s21, 0
      %p90 = por %p88, %p89
      %s92 = sadd.s32 %s91, 1
      %p95 = scmp.eq.s32.totalorder %s15, 1
      %p96 = scmp.ne.s32.totalorder %s91, %s93
      %p97 = scmp.eq.s32.totalorder %s15, 0
      %p98 = por %p96, %p97
      %p99 = scmp.ne.s32.totalorder %s91, %s93
      %p100 = scmp.eq.s32.totalorder %s20, 1
      %p101 = por %p99, %p100
      %p102 = scmp.ne.s32.totalorder %s93, %s94
      %p103 = scmp.eq.s32.totalorder %s20, 0
      %p104 = por %p102, %p103
      %p105 = scmp.ne.s32.totalorder %s93, %s94
      %p106 = scmp.eq.s32.totalorder %s21, 1
      %p107 = por %p105, %p106
      %p109 = scmp.ne.s32.totalorder %s94, %s108
      %p110 = scmp.eq.s32.totalorder %s21, 0
      %p111 = por %p109, %p110
      %s113 = sadd.s32 %s112, 1
      %p116 = scmp.eq.s32.totalorder %s15, 1
      %p117 = scmp.ne.s32.totalorder %s112, %s114
      %p118 = scmp.eq.s32.totalorder %s15, 0
      %p119 = por %p117, %p118
      %p120 = scmp.ne.s32.totalorder %s112, %s114
      %p121 = scmp.eq.s32.totalorder %s20, 1
      %p122 = por %p120, %p121
      %p123 = scmp.ne.s32.totalorder %s114, %s115
      %p124 = scmp.eq.s32.totalorder %s20, 0
      %p125 = por %p123, %p124
      %p126 = scmp.ne.s32.totalorder %s114, %s115
      %p127 = scmp.eq.s32.totalorder %s21, 1
      %p128 = por %p126, %p127
      %p130 = scmp.ne.s32.totalorder %s115, %s129
      %p131 = scmp.eq.s32.totalorder %s21, 0
      %p132 = por %p130, %p131
      %s133 = ssub.s32 %s15, %s22
      %p134 = scmp.eq.s32.totalorder %s133, 0
      %s136 = sadd.s32 %s135, 1
      %s137 = scalar_select %p134, %s135, %s136
      %p140 = pneg %p134
      %p141 = scmp.eq.s32.totalorder %s15, 1
      %p142 = por %p140, %p141
      %p143 = scmp.ne.s32.totalorder %s135, %s138
      %p144 = scmp.eq.s32.totalorder %s15, 0
      %p145 = por %p143, %p144
      %p146 = scmp.ne.s32.totalorder %s135, %s138
      %p147 = scmp.eq.s32.totalorder %s20, 1
      %p148 = por %p146, %p147
      %p149 = scmp.ne.s32.totalorder %s138, %s139
      %p150 = scmp.eq.s32.totalorder %s20, 0
      %p151 = por %p149, %p150
      %p152 = scmp.ne.s32.totalorder %s138, %s139
      %p153 = scmp.eq.s32.totalorder %s21, 1
      %p154 = por %p152, %p153
      %p156 = scmp.ne.s32.totalorder %s139, %s155
      %p157 = scmp.eq.s32.totalorder %s21, 0
      %p158 = por %p156, %p157
      %p159 = scmp.le.s32.totalorder 1, %s15
      %p160 = scmp.lt.s32.totalorder %s15, 3
      %p161 = pnand %p159, %p160
      %p162 = pneg %p161
      // Predicated region
      $region9: #{tpu_custom_call.1} parent=5 // pred_check
        _
      $region10: #{tpu_custom_call.1} parent=5 // pred_check_branch
        %164 = sbr.rel (%p161) target = $region12
      $region11: #{tpu_custom_call.1} parent=5 // pred_region
        %s165 = ssub.s32 %s15, 1
        // Predicated region
        $region13: #{tpu_custom_call.1} parent=11 // pred_check
          %p166 = pneg %p62
        $region14: #{tpu_custom_call.1} parent=11 // pred_check_branch
          %168 = sbr.rel (%p166) target = $region16
        $region15: #{tpu_custom_call.1} parent=11 // pred_region
          _
        $region16: #{tpu_custom_call.1} parent=11 // pred_fallthru
          _
        // Predicated region
        $region17: #{tpu_custom_call.1} parent=11 // pred_check
          %p169 = pneg %p83
        $region18: #{tpu_custom_call.1} parent=11 // pred_check_branch
          %171 = sbr.rel (%p169) target = $region20
        $region19: #{tpu_custom_call.1} parent=11 // pred_region
          _
        $region20: #{tpu_custom_call.1} parent=11 // pred_fallthru
          _
        // Predicated region
        $region21: #{tpu_custom_call.1} parent=11 // pred_check
          %p172 = pneg %p104
        $region22: #{tpu_custom_call.1} parent=11 // pred_check_branch
          %174 = sbr.rel (%p172) target = $region24
        $region23: #{tpu_custom_call.1} parent=11 // pred_region
          %s176 = ssub.s32 1024, 1024
          %177 = vsyncadd [#allocation5], %s176
          %s178 = sshll.u32 [#allocation4], 4
          %s179 = int_to_ptr.vmem [resolvable:$true] %s178
          %184 = dma.hbm_to_vmem [thread:$0]  %s3, 1024, %s179, [#allocation5], 128, 128, 8
        $region24: #{tpu_custom_call.1} parent=11 // pred_fallthru
          _
        // Predicated region
        $region25: #{tpu_custom_call.1} parent=11 // pred_check
          %p185 = pneg %p125
        $region26: #{tpu_custom_call.1} parent=11 // pred_check_branch
          %187 = sbr.rel (%p185) target = $region28
        $region27: #{tpu_custom_call.1} parent=11 // pred_region
          _
        $region28: #{tpu_custom_call.1} parent=11 // pred_fallthru
          _
      $region12: #{tpu_custom_call.1} parent=5 // pred_fallthru
        _
      %p188 = scmp.lt.s32.totalorder %s15, 2
      // Predicated region
      $region29: #{tpu_custom_call.1} parent=5 // pred_check
        %p189 = pneg %p188
      $region30: #{tpu_custom_call.1} parent=5 // pred_check_branch
        %191 = sbr.rel (%p189) target = $region32
      $region31: #{tpu_custom_call.1} parent=5 // pred_region
        // Predicated region
        $region33: #{tpu_custom_call.1} parent=31 // pred_check
          %p192 = pneg %p35
        $region34: #{tpu_custom_call.1} parent=31 // pred_check_branch
          %194 = sbr.rel (%p192) target = $region36
        $region35: #{tpu_custom_call.1} parent=31 // pred_region
          %s195 = sand.u32 %s25, 1
          %s196 = scalar_lea.sflag [#allocation3], %s195
          %s197 = sand.u32 %s25, 1
          %s198 = smul.addr %s197, 128
          %s199 = scalar_lea.vmem [#allocation2], %s198
          %s200 = smul.u32 32, %s15
          %s202 = ssub.s32 2048, 2048
          %203 = vsyncadd %s196, %s202
          %s204 = smul.addr %s200, 64
          %s205 = scalar_lea.hbm %s0, %s204
          %s206 = sshll.u32 %s199, 4
          %s207 = int_to_ptr.vmem [resolvable:$true] %s206
          %212 = dma.hbm_to_vmem [thread:$0]  %s205, 2048, %s207, %s196, 64, 64, 4
        $region36: #{tpu_custom_call.1} parent=31 // pred_fallthru
          _
      $region32: #{tpu_custom_call.1} parent=5 // pred_fallthru
        _
      %p213 = scmp.le.s32.totalorder 1, %s15
      %p214 = scmp.lt.s32.totalorder %s15, 3
      %p215 = pnand %p213, %p214
      %p216 = pneg %p215
      // Predicated region
      $region37: #{tpu_custom_call.1} parent=5 // pred_check
        _
      $region38: #{tpu_custom_call.1} parent=5 // pred_check_branch
        %218 = sbr.rel (%p215) target = $region40
      $region39: #{tpu_custom_call.1} parent=5 // pred_region
        %s219 = ssub.s32 %s15, 1
        %s220 = sand.u32 %s28, 1
        %s221 = scalar_lea.sflag [#allocation3], %s220
        %s222 = sand.u32 %s28, 1
        %s223 = smul.addr %s222, 128
        %s224 = scalar_lea.vmem [#allocation2], %s223
        // Predicated region
        $region41: #{tpu_custom_call.1} parent=39 // pred_check
          %p225 = pneg %p41
        $region42: #{tpu_custom_call.1} parent=39 // pred_check_branch
          %227 = sbr.rel (%p225) target = $region44
        $region43: #{tpu_custom_call.1} parent=39 // pred_region
          %228 = dma.done %s221, 2048
        $region44: #{tpu_custom_call.1} parent=39 // pred_fallthru
          _
        // Predicated region
        $region45: #{tpu_custom_call.1} parent=39 // pred_check
          %p229 = pneg %p104
        $region46: #{tpu_custom_call.1} parent=39 // pred_check_branch
          %231 = sbr.rel (%p229) target = $region48
        $region47: #{tpu_custom_call.1} parent=39 // pred_region
          %232 = dma.done [#allocation5], 1024
        $region48: #{tpu_custom_call.1} parent=39 // pred_fallthru
          _
        %s233 = sand.u32 %s28, 1
        %s234 = scalar_lea.sflag [#allocation3], %s233
        %s235 = sand.u32 %s28, 1
        %s236 = smul.addr %s235, 128
        %s237 = scalar_lea.vmem [#allocation2], %s236
        %p238 = pneg %p41
        %p239 = pneg %p38
        %p240 = pneg %p62
        %p241 = pneg %p59
        %p242 = pneg %p83
        %p243 = pneg %p80
        %p244 = pneg %p104
        %p245 = pneg %p101
        %p246 = pneg %p125
        %p247 = pneg %p122
        %p248 = pneg %p151
        %p249 = pneg %p148
        %s250 = smul.u32 32, %s20
        %p251 = scmp.lt.s32.totalorder %s250, 63
        %s252 = scalar_select %p251, %s250, 63
        %s253 = smul.addr %s252, 8
        %s254 = scalar_lea.vmem %s5, %s253
        %s255 = smul.u32 32, %s20
        %s256 = smul.u32 32, %s20
        %p257 = scmp.lt.s32.totalorder %s256, 63
        %s258 = scalar_select %p257, %s256, 63
        %s259 = smul.addr %s258, 8
        %s260 = scalar_lea.vmem %s5, %s259
        %s261 = smul.u32 32, %s20
        %v263 = vld [vmem:[%s224] sm:$0xf]
        %v264 = vld [vmem:[%s224 + $0x4] sm:$0xf]
        %v265 = vld [vmem:[%s224 + $0x8] sm:$0xf]
        %v266 = vld [vmem:[%s224 + $0xc] sm:$0xf]
        %v267 = vld [vmem:[%s224 + $0x10] sm:$0xf]
        %v268 = vld [vmem:[%s224 + $0x14] sm:$0xf]
        %v269 = vld [vmem:[%s224 + $0x18] sm:$0xf]
        %v270 = vld [vmem:[%s224 + $0x1c] sm:$0xf]
        %v271 = vld [vmem:[%s224 + $0x20] sm:$0xf]
        %v272 = vld [vmem:[%s224 + $0x24] sm:$0xf]
        %v273 = vld [vmem:[%s224 + $0x28] sm:$0xf]
        %v274 = vld [vmem:[%s224 + $0x2c] sm:$0xf]
        %v275 = vld [vmem:[%s224 + $0x30] sm:$0xf]
        %v276 = vld [vmem:[%s224 + $0x34] sm:$0xf]
        %v277 = vld [vmem:[%s224 + $0x38] sm:$0xf]
        %v278 = vld [vmem:[%s224 + $0x3c] sm:$0xf]
        %v279 = vld [vmem:[%s224 + $0x40] sm:$0xf]
        %v280 = vld [vmem:[%s224 + $0x44] sm:$0xf]
        %v281 = vld [vmem:[%s224 + $0x48] sm:$0xf]
        %v282 = vld [vmem:[%s224 + $0x4c] sm:$0xf]
        %v283 = vld [vmem:[%s224 + $0x50] sm:$0xf]
        %v284 = vld [vmem:[%s224 + $0x54] sm:$0xf]
        %v285 = vld [vmem:[%s224 + $0x58] sm:$0xf]
        %v286 = vld [vmem:[%s224 + $0x5c] sm:$0xf]
        %v287 = vld [vmem:[%s224 + $0x60] sm:$0xf]
        %v288 = vld [vmem:[%s224 + $0x64] sm:$0xf]
        %v289 = vld [vmem:[%s224 + $0x68] sm:$0xf]
        %v290 = vld [vmem:[%s224 + $0x6c] sm:$0xf]
        %v291 = vld [vmem:[%s224 + $0x70] sm:$0xf]
        %v292 = vld [vmem:[%s224 + $0x74] sm:$0xf]
        %v293 = vld [vmem:[%s224 + $0x78] sm:$0xf]
        %v294 = vld [vmem:[%s224 + $0x7c] sm:$0xf]
        %v295 = vld [vmem:[%s4] sm:$0x1]
        %v296 = vld [vmem:[%s4 + $0x1] sm:$0x1]
        %v297 = vld [vmem:[%s4 + $0x2] sm:$0x1]
        %v298 = vld [vmem:[%s4 + $0x3] sm:$0x1]
        %v299 = vld [vmem:[%s4 + $0x4] sm:$0x1]
        %v300 = vld [vmem:[%s1] sm:$0xf]
        %v301 = vld [vmem:[%s1 + $0x4] sm:$0xf]
        %v302 = vld [vmem:[%s1 + $0x8] sm:$0xf]
        %v303 = vld [vmem:[%s1 + $0xc] sm:$0xf]
        %v304 = vld [vmem:[%s1 + $0x10] sm:$0xf]
        %v305 = vld [vmem:[%s1 + $0x14] sm:$0xf]
        %v306 = vld [vmem:[%s1 + $0x18] sm:$0xf]
        %v307 = vld [vmem:[%s1 + $0x1c] sm:$0xf]
        %v308 = vld [vmem:[%s1 + $0x20] sm:$0xf]
        %v309 = vld [vmem:[%s1 + $0x24] sm:$0xf]
        %v310 = vld [vmem:[%s1 + $0x28] sm:$0xf]
        %v311 = vld [vmem:[%s1 + $0x2c] sm:$0xf]
        %v312 = vld [vmem:[%s1 + $0x30] sm:$0xf]
        %v313 = vld [vmem:[%s1 + $0x34] sm:$0xf]
        %v314 = vld [vmem:[%s1 + $0x38] sm:$0xf]
        %v315 = vld [vmem:[%s1 + $0x3c] sm:$0xf]
        %v316 = vlaneseq
        %v317 = vshrl.u32 %v316, 7
        %v318 = vsub.s32 0, %v317
        %v319 = vrot.slane %v295, %v318
        %v352 = vunpack.c.l.b16 %v263
        %v353 = vunpack.c.l.b16 %v264
        %v354 = vunpack.c.l.b16 %v265
        %v355 = vunpack.c.l.b16 %v266
        %v356 = vunpack.c.l.b16 %v267
        %v357 = vunpack.c.l.b16 %v268
        %v358 = vunpack.c.l.b16 %v269
        %v359 = vunpack.c.l.b16 %v270
        %v360 = vunpack.c.l.b16 %v271
        %v361 = vunpack.c.l.b16 %v272
        %v362 = vunpack.c.l.b16 %v273
        %v363 = vunpack.c.l.b16 %v274
        %v364 = vunpack.c.l.b16 %v275
        %v365 = vunpack.c.l.b16 %v276
        %v366 = vunpack.c.l.b16 %v277
        %v367 = vunpack.c.l.b16 %v278
        %v368 = vunpack.c.l.b16 %v279
        %v369 = vunpack.c.l.b16 %v280
        %v370 = vunpack.c.l.b16 %v281
        %v371 = vunpack.c.l.b16 %v282
        %v372 = vunpack.c.l.b16 %v283
        %v373 = vunpack.c.l.b16 %v284
        %v374 = vunpack.c.l.b16 %v285
        %v375 = vunpack.c.l.b16 %v286
        %v376 = vunpack.c.l.b16 %v287
        %v377 = vunpack.c.l.b16 %v288
        %v378 = vunpack.c.l.b16 %v289
        %v379 = vunpack.c.l.b16 %v290
        %v380 = vunpack.c.l.b16 %v291
        %v381 = vunpack.c.l.b16 %v292
        %v382 = vunpack.c.l.b16 %v293
        %v383 = vunpack.c.l.b16 %v294
        %v384 = vpack.c.b16 %v353, %v352
        %v385 = vpack.c.b16 %v355, %v354
        %v386 = vpack.c.b16 %v357, %v356
        %v387 = vpack.c.b16 %v359, %v358
        %v388 = vpack.c.b16 %v361, %v360
        %v389 = vpack.c.b16 %v363, %v362
        %v390 = vpack.c.b16 %v365, %v364
        %v391 = vpack.c.b16 %v367, %v366
        %v392 = vpack.c.b16 %v369, %v368
        %v393 = vpack.c.b16 %v371, %v370
        %v394 = vpack.c.b16 %v373, %v372
        %v395 = vpack.c.b16 %v375, %v374
        %v396 = vpack.c.b16 %v377, %v376
        %v397 = vpack.c.b16 %v379, %v378
        %v398 = vpack.c.b16 %v381, %v380
        %v399 = vpack.c.b16 %v383, %v382
        %v432 = vunpack.c.l.b16 %v300
        %v433 = vunpack.c.l.b16 %v301
        %v434 = vunpack.c.l.b16 %v302
        %v435 = vunpack.c.l.b16 %v303
        %v436 = vunpack.c.l.b16 %v304
        %v437 = vunpack.c.l.b16 %v305
        %v438 = vunpack.c.l.b16 %v306
        %v439 = vunpack.c.l.b16 %v307
        %v440 = vunpack.c.l.b16 %v308
        %v441 = vunpack.c.l.b16 %v309
        %v442 = vunpack.c.l.b16 %v310
        %v443 = vunpack.c.l.b16 %v311
        %v444 = vunpack.c.l.b16 %v312
        %v445 = vunpack.c.l.b16 %v313
        %v446 = vunpack.c.l.b16 %v314
        %v447 = vunpack.c.l.b16 %v315
        %v448 = vpack.c.b16 %v433, %v432
        %v449 = vpack.c.b16 %v435, %v434
        %v450 = vpack.c.b16 %v437, %v436
        %v451 = vpack.c.b16 %v439, %v438
        %v452 = vpack.c.b16 %v441, %v440
        %v453 = vpack.c.b16 %v443, %v442
        %v454 = vpack.c.b16 %v445, %v444
        %v455 = vpack.c.b16 %v447, %v446
        %464 = vmatprep.subr.bf16.mxu0 0
        %465 = vmatpush1.bf16.msra.mxu0 %v455
        %466 = vmatprep.subr.bf16.mxu0 0
        %467 = vmatpush1.bf16.msra.mxu0 %v454
        %468 = vmatprep.subr.bf16.mxu0 0
        %469 = vmatpush1.bf16.msra.mxu0 %v453
        %470 = vmatprep.subr.bf16.mxu0 0
        %471 = vmatpush1.bf16.msra.mxu0 %v452
        %472 = vmatprep.subr.bf16.mxu0 0
        %473 = vmatpush1.bf16.msra.mxu0 %v451
        %474 = vmatprep.subr.bf16.mxu0 0
        %475 = vmatpush1.bf16.msra.mxu0 %v450
        %476 = vmatprep.subr.bf16.mxu0 0
        %477 = vmatpush1.bf16.msra.mxu0 %v449
        %478 = vmatprep.subr.bf16.mxu0 0
        %479 = vmatpush1.bf16.msra.mxu0 %v448
        %480 = vmatprep.subr.bf16.mxu0 0
        %481 = vmatpush2.bf16.msra.mxu0 0
        %482 = vmatprep.subr.bf16.mxu0 0
        %483 = vmatpush2.bf16.msra.mxu0 0
        %484 = vmatprep.subr.bf16.mxu0 0
        %485 = vmatpush2.bf16.msra.mxu0 0
        %486 = vmatprep.subr.bf16.mxu0 0
        %487 = vmatpush2.bf16.msra.mxu0 0
        %488 = vmatprep.subr.bf16.mxu0 0
        %489 = vmatpush2.bf16.msra.mxu0 0
        %490 = vmatprep.subr.bf16.mxu0 0
        %491 = vmatpush2.bf16.msra.mxu0 0
        %492 = vmatprep.subr.bf16.mxu0 0
        %493 = vmatpush2.bf16.msra.mxu0 0
        %494 = vmatprep.subr.bf16.mxu0 0
        %495 = vmatpush2.bf16.msra.mxu0 0
        %496 = vmatprep.mubr.bf16.mxu0 0
        %497 = vmatmul.mubr.bf16.gmra.mxu0 %v384
        %v498 = vpop.f32.mrf.mxu0
        %v499 = vadd.f32 %v319, %v498
        %v500 = vpop.f32.mrf.mxu0
        %v501 = vpop.f32.mrf.mxu0
        %v502 = vadd.f32 %v319, %v501
        %v503 = vpop.f32.mrf.mxu0
        %504 = vmatprep.mubr.bf16.mxu0 0
        %505 = vmatmul.mubr.bf16.gmra.mxu0 %v385
        %v506 = vpop.f32.mrf.mxu0
        %v507 = vadd.f32 %v319, %v506
        %v508 = vpop.f32.mrf.mxu0
        %v509 = vpop.f32.mrf.mxu0
        %v510 = vadd.f32 %v319, %v509
        %v511 = vpop.f32.mrf.mxu0
        %512 = vmatprep.mubr.bf16.mxu0 0
        %513 = vmatmul.mubr.bf16.gmra.mxu0 %v386
        %v514 = vpop.f32.mrf.mxu0
        %v515 = vadd.f32 %v319, %v514
        %v516 = vpop.f32.mrf.mxu0
        %v517 = vpop.f32.mrf.mxu0
        %v518 = vadd.f32 %v319, %v517
        %v519 = vpop.f32.mrf.mxu0
        %520 = vmatprep.mubr.bf16.mxu0 0
        %521 = vmatmul.mubr.bf16.gmra.mxu0 %v387
        %v522 = vpop.f32.mrf.mxu0
        %v523 = vadd.f32 %v319, %v522
        %v524 = vpop.f32.mrf.mxu0
        %v525 = vpop.f32.mrf.mxu0
        %v526 = vadd.f32 %v319, %v525
        %v527 = vpop.f32.mrf.mxu0
        %528 = vmatprep.mubr.bf16.mxu0 0
        %529 = vmatmul.mubr.bf16.gmra.mxu0 %v388
        %v530 = vpop.f32.mrf.mxu0
        %v531 = vadd.f32 %v319, %v530
        %v532 = vpop.f32.mrf.mxu0
        %v533 = vpop.f32.mrf.mxu0
        %v534 = vadd.f32 %v319, %v533
        %v535 = vpop.f32.mrf.mxu0
        %536 = vmatprep.mubr.bf16.mxu0 0
        %537 = vmatmul.mubr.bf16.gmra.mxu0 %v389
        %v538 = vpop.f32.mrf.mxu0
        %v539 = vadd.f32 %v319, %v538
        %v540 = vpop.f32.mrf.mxu0
        %v541 = vpop.f32.mrf.mxu0
        %v542 = vadd.f32 %v319, %v541
        %v543 = vpop.f32.mrf.mxu0
        %544 = vmatprep.mubr.bf16.mxu0 0
        %545 = vmatmul.mubr.bf16.gmra.mxu0 %v390
        %v546 = vpop.f32.mrf.mxu0
        %v547 = vadd.f32 %v319, %v546
        %v548 = vpop.f32.mrf.mxu0
        %v549 = vpop.f32.mrf.mxu0
        %v550 = vadd.f32 %v319, %v549
        %v551 = vpop.f32.mrf.mxu0
        %552 = vmatprep.mubr.bf16.mxu0 0
        %553 = vmatmul.mubr.bf16.gmra.mxu0 %v391
        %v554 = vpop.f32.mrf.mxu0
        %v555 = vadd.f32 %v319, %v554
        %v556 = vpop.f32.mrf.mxu0
        %v557 = vpop.f32.mrf.mxu0
        %v558 = vadd.f32 %v319, %v557
        %v559 = vpop.f32.mrf.mxu0
        %560 = vmatprep.mubr.bf16.mxu0 0
        %561 = vmatmul.mubr.bf16.gmra.mxu0 %v392
        %v562 = vpop.f32.mrf.mxu0
        %v563 = vadd.f32 %v319, %v562
        %v564 = vpop.f32.mrf.mxu0
        %v565 = vpop.f32.mrf.mxu0
        %v566 = vadd.f32 %v319, %v565
        %v567 = vpop.f32.mrf.mxu0
        %568 = vmatprep.mubr.bf16.mxu0 0
        %569 = vmatmul.mubr.bf16.gmra.mxu0 %v393
        %v570 = vpop.f32.mrf.mxu0
        %v571 = vadd.f32 %v319, %v570
        %v572 = vpop.f32.mrf.mxu0
        %v573 = vpop.f32.mrf.mxu0
        %v574 = vadd.f32 %v319, %v573
        %v575 = vpop.f32.mrf.mxu0
        %576 = vmatprep.mubr.bf16.mxu0 0
        %577 = vmatmul.mubr.bf16.gmra.mxu0 %v394
        %v578 = vpop.f32.mrf.mxu0
        %v579 = vadd.f32 %v319, %v578
        %v580 = vpop.f32.mrf.mxu0
        %v581 = vpop.f32.mrf.mxu0
        %v582 = vadd.f32 %v319, %v581
        %v583 = vpop.f32.mrf.mxu0
        %584 = vmatprep.mubr.bf16.mxu0 0
        %585 = vmatmul.mubr.bf16.gmra.mxu0 %v395
        %v586 = vpop.f32.mrf.mxu0
        %v587 = vadd.f32 %v319, %v586
        %v588 = vpop.f32.mrf.mxu0
        %v589 = vpop.f32.mrf.mxu0
        %v590 = vadd.f32 %v319, %v589
        %v591 = vpop.f32.mrf.mxu0
        %592 = vmatprep.mubr.bf16.mxu0 0
        %593 = vmatmul.mubr.bf16.gmra.mxu0 %v396
        %v594 = vpop.f32.mrf.mxu0
        %v595 = vadd.f32 %v319, %v594
        %v596 = vpop.f32.mrf.mxu0
        %v597 = vpop.f32.mrf.mxu0
        %v598 = vadd.f32 %v319, %v597
        %v599 = vpop.f32.mrf.mxu0
        %600 = vmatprep.mubr.bf16.mxu0 0
        %601 = vmatmul.mubr.bf16.gmra.mxu0 %v397
        %v602 = vpop.f32.mrf.mxu0
        %v603 = vadd.f32 %v319, %v602
        %v604 = vpop.f32.mrf.mxu0
        %v605 = vpop.f32.mrf.mxu0
        %v606 = vadd.f32 %v319, %v605
        %v607 = vpop.f32.mrf.mxu0
        %608 = vmatprep.mubr.bf16.mxu0 0
        %609 = vmatmul.mubr.bf16.gmra.mxu0 %v398
        %v610 = vpop.f32.mrf.mxu0
        %v611 = vadd.f32 %v319, %v610
        %v612 = vpop.f32.mrf.mxu0
        %v613 = vpop.f32.mrf.mxu0
        %v614 = vadd.f32 %v319, %v613
        %v615 = vpop.f32.mrf.mxu0
        %616 = vmatprep.mubr.bf16.mxu0 0
        %617 = vmatmul.mubr.bf16.gmra.mxu0 %v399
        %v618 = vpop.f32.mrf.mxu0
        %v619 = vadd.f32 %v319, %v618
        %v620 = vpop.f32.mrf.mxu0
        %v621 = vpop.f32.mrf.mxu0
        %v622 = vadd.f32 %v319, %v621
        %v623 = vpop.f32.mrf.mxu0
        %624 = vdwg.mxu0
        %v625 = vmax.f32 %v499, 0.0
        %v626 = vmax.f32 %v502, 0.0
        %v627 = vmax.f32 %v507, 0.0
        %v628 = vmax.f32 %v510, 0.0
        %v629 = vmax.f32 %v515, 0.0
        %v630 = vmax.f32 %v518, 0.0
        %v631 = vmax.f32 %v523, 0.0
        %v632 = vmax.f32 %v526, 0.0
        %v633 = vmax.f32 %v531, 0.0
        %v634 = vmax.f32 %v534, 0.0
        %v635 = vmax.f32 %v539, 0.0
        %v636 = vmax.f32 %v542, 0.0
        %v637 = vmax.f32 %v547, 0.0
        %v638 = vmax.f32 %v550, 0.0
        %v639 = vmax.f32 %v555, 0.0
        %v640 = vmax.f32 %v558, 0.0
        %v641 = vmax.f32 %v563, 0.0
        %v642 = vmax.f32 %v566, 0.0
        %v643 = vmax.f32 %v571, 0.0
        %v644 = vmax.f32 %v574, 0.0
        %v645 = vmax.f32 %v579, 0.0
        %v646 = vmax.f32 %v582, 0.0
        %v647 = vmax.f32 %v587, 0.0
        %v648 = vmax.f32 %v590, 0.0
        %v649 = vmax.f32 %v595, 0.0
        %v650 = vmax.f32 %v598, 0.0
        %v651 = vmax.f32 %v603, 0.0
        %v652 = vmax.f32 %v606, 0.0
        %v653 = vmax.f32 %v611, 0.0
        %v654 = vmax.f32 %v614, 0.0
        %v655 = vmax.f32 %v619, 0.0
        %v656 = vmax.f32 %v622, 0.0
        %v657 = vld [vmem:[%s2] sm:$0xff]
        %v658 = vld [vmem:[%s2 + $0x8] sm:$0xff]
        %v659 = vld [vmem:[%s2 + $0x10] sm:$0xff]
        %v660 = vld [vmem:[%s2 + $0x18] sm:$0xff]
        %v661 = vld [vmem:[%s2 + $0x20] sm:$0xff]
        %v662 = vld [vmem:[%s2 + $0x28] sm:$0xff]
        %v663 = vld [vmem:[%s2 + $0x30] sm:$0xff]
        %v664 = vld [vmem:[%s2 + $0x38] sm:$0xff]
        %v665 = vlaneseq
        %v666 = vshrl.u32 %v665, 7
        %v667 = vsub.s32 0, %v666
        %v668 = vrot.slane %v296, %v667
        %vm669 = vcmask 523264
        %v671 = vsel %vm669, %v625, 0
        %v674 = vsel %vm669, %v626, 0
        %v677 = vsel %vm669, %v627, 0
        %v680 = vsel %vm669, %v628, 0
        %v683 = vsel %vm669, %v629, 0
        %v686 = vsel %vm669, %v630, 0
        %v689 = vsel %vm669, %v631, 0
        %v692 = vsel %vm669, %v632, 0
        %v695 = vsel %vm669, %v633, 0
        %v698 = vsel %vm669, %v634, 0
        %v701 = vsel %vm669, %v635, 0
        %v704 = vsel %vm669, %v636, 0
        %v707 = vsel %vm669, %v637, 0
        %v710 = vsel %vm669, %v638, 0
        %v713 = vsel %vm669, %v639, 0
        %v716 = vsel %vm669, %v640, 0
        %v719 = vsel %vm669, %v641, 0
        %v722 = vsel %vm669, %v642, 0
        %v725 = vsel %vm669, %v643, 0
        %v728 = vsel %vm669, %v644, 0
        %v731 = vsel %vm669, %v645, 0
        %v734 = vsel %vm669, %v646, 0
        %v737 = vsel %vm669, %v647, 0
        %v740 = vsel %vm669, %v648, 0
        %v743 = vsel %vm669, %v649, 0
        %v746 = vsel %vm669, %v650, 0
        %v749 = vsel %vm669, %v651, 0
        %v752 = vsel %vm669, %v652, 0
        %v755 = vsel %vm669, %v653, 0
        %v758 = vsel %vm669, %v654, 0
        %v761 = vsel %vm669, %v655, 0
        %v764 = vsel %vm669, %v656, 0
        %766 = vmatprep.subr.mxu0 0.0
        %767 = vmatpush1.msra.mxu0 0.0
        %768 = vmatprep.subr.mxu0 0.0
        %769 = vmatpush1.msra.mxu0 0.0
        %770 = vmatprep.subr.mxu0 0.0
        %771 = vmatpush1.msra.mxu0 0.0
        %772 = vmatprep.subr.mxu0 0.0
        %773 = vmatpush1.msra.mxu0 0.0
        %774 = vmatprep.subr.mxu0 0.0
        %775 = vmatpush1.msra.mxu0 0.0
        %776 = vmatprep.subr.mxu0 0.0
        %777 = vmatpush1.msra.mxu0 0.0
        %778 = vmatprep.subr.mxu0 0.0
        %779 = vmatpush1.msra.mxu0 0.0
        %780 = vmatprep.subr.mxu0 0.0
        %781 = vmatpush1.msra.mxu0 0.0
        %782 = vmatprep.subr.mxu0 0.0
        %783 = vmatpush1.msra.mxu0 %v664
        %784 = vmatprep.subr.mxu0 0.0
        %785 = vmatpush1.msra.mxu0 %v663
        %786 = vmatprep.subr.mxu0 0.0
        %787 = vmatpush1.msra.mxu0 %v662
        %788 = vmatprep.subr.mxu0 0.0
        %789 = vmatpush1.msra.mxu0 %v661
        %790 = vmatprep.subr.mxu0 0.0
        %791 = vmatpush1.msra.mxu0 %v660
        %792 = vmatprep.subr.mxu0 0.0
        %793 = vmatpush1.msra.mxu0 %v659
        %794 = vmatprep.subr.mxu0 0.0
        %795 = vmatpush1.msra.mxu0 %v658
        %796 = vmatprep.subr.mxu0 0.0
        %797 = vmatpush1.msra.mxu0 %v657
        %798 = vmatprep.subr.mxu0 0.0
        %799 = vmatpush2.msra.mxu0 0.0
        %800 = vmatprep.subr.mxu0 0.0
        %801 = vmatpush2.msra.mxu0 0.0
        %802 = vmatprep.subr.mxu0 0.0
        %803 = vmatpush2.msra.mxu0 0.0
        %804 = vmatprep.subr.mxu0 0.0
        %805 = vmatpush2.msra.mxu0 0.0
        %806 = vmatprep.subr.mxu0 0.0
        %807 = vmatpush2.msra.mxu0 0.0
        %808 = vmatprep.subr.mxu0 0.0
        %809 = vmatpush2.msra.mxu0 0.0
        %810 = vmatprep.subr.mxu0 0.0
        %811 = vmatpush2.msra.mxu0 0.0
        %812 = vmatprep.subr.mxu0 0.0
        %813 = vmatpush2.msra.mxu0 0.0
        %814 = vmatprep.subr.mxu0 0.0
        %815 = vmatpush2.msra.mxu0 0.0
        %816 = vmatprep.subr.mxu0 0.0
        %817 = vmatpush2.msra.mxu0 0.0
        %818 = vmatprep.subr.mxu0 0.0
        %819 = vmatpush2.msra.mxu0 0.0
        %820 = vmatprep.subr.mxu0 0.0
        %821 = vmatpush2.msra.mxu0 0.0
        %822 = vmatprep.subr.mxu0 0.0
        %823 = vmatpush2.msra.mxu0 0.0
        %824 = vmatprep.subr.mxu0 0.0
        %825 = vmatpush2.msra.mxu0 0.0
        %826 = vmatprep.subr.mxu0 0.0
        %827 = vmatpush2.msra.mxu0 0.0
        %828 = vmatprep.subr.mxu0 0.0
        %829 = vmatpush2.msra.mxu0 0.0
        %830 = vmatprep.mubr.f32.mxu0 0.0
        %831 = vmatmul.mubr.f32.gmra.mxu0 %v671
        %v832 = vpop.f32.mrf.mxu0
        %v833 = vadd.f32 %v668, %v832
        %v834 = vpop.f32.mrf.mxu0
        %835 = vmatprep.mubr.f32.mxu0 0.0
        %836 = vmatmul.mubr.f32.gmra.mxu0 %v674
        %v837 = vpop.f32.mrf.mxu0
        %v838 = vadd.f32 %v668, %v837
        %v839 = vpop.f32.mrf.mxu0
        %840 = vmatprep.mubr.f32.mxu0 0.0
        %841 = vmatmul.mubr.f32.gmra.mxu0 %v677
        %v842 = vpop.f32.mrf.mxu0
        %v843 = vadd.f32 %v668, %v842
        %v844 = vpop.f32.mrf.mxu0
        %845 = vmatprep.mubr.f32.mxu0 0.0
        %846 = vmatmul.mubr.f32.gmra.mxu0 %v680
        %v847 = vpop.f32.mrf.mxu0
        %v848 = vadd.f32 %v668, %v847
        %v849 = vpop.f32.mrf.mxu0
        %850 = vmatprep.mubr.f32.mxu0 0.0
        %851 = vmatmul.mubr.f32.gmra.mxu0 %v683
        %v852 = vpop.f32.mrf.mxu0
        %v853 = vadd.f32 %v668, %v852
        %v854 = vpop.f32.mrf.mxu0
        %855 = vmatprep.mubr.f32.mxu0 0.0
        %856 = vmatmul.mubr.f32.gmra.mxu0 %v686
        %v857 = vpop.f32.mrf.mxu0
        %v858 = vadd.f32 %v668, %v857
        %v859 = vpop.f32.mrf.mxu0
        %860 = vmatprep.mubr.f32.mxu0 0.0
        %861 = vmatmul.mubr.f32.gmra.mxu0 %v689
        %v862 = vpop.f32.mrf.mxu0
        %v863 = vadd.f32 %v668, %v862
        %v864 = vpop.f32.mrf.mxu0
        %865 = vmatprep.mubr.f32.mxu0 0.0
        %866 = vmatmul.mubr.f32.gmra.mxu0 %v692
        %v867 = vpop.f32.mrf.mxu0
        %v868 = vadd.f32 %v668, %v867
        %v869 = vpop.f32.mrf.mxu0
        %870 = vmatprep.mubr.f32.mxu0 0.0
        %871 = vmatmul.mubr.f32.gmra.mxu0 %v695
        %v872 = vpop.f32.mrf.mxu0
        %v873 = vadd.f32 %v668, %v872
        %v874 = vpop.f32.mrf.mxu0
        %875 = vmatprep.mubr.f32.mxu0 0.0
        %876 = vmatmul.mubr.f32.gmra.mxu0 %v698
        %v877 = vpop.f32.mrf.mxu0
        %v878 = vadd.f32 %v668, %v877
        %v879 = vpop.f32.mrf.mxu0
        %880 = vmatprep.mubr.f32.mxu0 0.0
        %881 = vmatmul.mubr.f32.gmra.mxu0 %v701
        %v882 = vpop.f32.mrf.mxu0
        %v883 = vadd.f32 %v668, %v882
        %v884 = vpop.f32.mrf.mxu0
        %885 = vmatprep.mubr.f32.mxu0 0.0
        %886 = vmatmul.mubr.f32.gmra.mxu0 %v704
        %v887 = vpop.f32.mrf.mxu0
        %v888 = vadd.f32 %v668, %v887
        %v889 = vpop.f32.mrf.mxu0
        %890 = vmatprep.mubr.f32.mxu0 0.0
        %891 = vmatmul.mubr.f32.gmra.mxu0 %v707
        %v892 = vpop.f32.mrf.mxu0
        %v893 = vadd.f32 %v668, %v892
        %v894 = vpop.f32.mrf.mxu0
        %895 = vmatprep.mubr.f32.mxu0 0.0
        %896 = vmatmul.mubr.f32.gmra.mxu0 %v710
        %v897 = vpop.f32.mrf.mxu0
        %v898 = vadd.f32 %v668, %v897
        %v899 = vpop.f32.mrf.mxu0
        %900 = vmatprep.mubr.f32.mxu0 0.0
        %901 = vmatmul.mubr.f32.gmra.mxu0 %v713
        %v902 = vpop.f32.mrf.mxu0
        %v903 = vadd.f32 %v668, %v902
        %v904 = vpop.f32.mrf.mxu0
        %905 = vmatprep.mubr.f32.mxu0 0.0
        %906 = vmatmul.mubr.f32.gmra.mxu0 %v716
        %v907 = vpop.f32.mrf.mxu0
        %v908 = vadd.f32 %v668, %v907
        %v909 = vpop.f32.mrf.mxu0
        %910 = vmatprep.mubr.f32.mxu0 0.0
        %911 = vmatmul.mubr.f32.gmra.mxu0 %v719
        %v912 = vpop.f32.mrf.mxu0
        %v913 = vadd.f32 %v668, %v912
        %v914 = vpop.f32.mrf.mxu0
        %915 = vmatprep.mubr.f32.mxu0 0.0
        %916 = vmatmul.mubr.f32.gmra.mxu0 %v722
        %v917 = vpop.f32.mrf.mxu0
        %v918 = vadd.f32 %v668, %v917
        %v919 = vpop.f32.mrf.mxu0
        %920 = vmatprep.mubr.f32.mxu0 0.0
        %921 = vmatmul.mubr.f32.gmra.mxu0 %v725
        %v922 = vpop.f32.mrf.mxu0
        %v923 = vadd.f32 %v668, %v922
        %v924 = vpop.f32.mrf.mxu0
        %925 = vmatprep.mubr.f32.mxu0 0.0
        %926 = vmatmul.mubr.f32.gmra.mxu0 %v728
        %v927 = vpop.f32.mrf.mxu0
        %v928 = vadd.f32 %v668, %v927
        %v929 = vpop.f32.mrf.mxu0
        %930 = vmatprep.mubr.f32.mxu0 0.0
        %931 = vmatmul.mubr.f32.gmra.mxu0 %v731
        %v932 = vpop.f32.mrf.mxu0
        %v933 = vadd.f32 %v668, %v932
        %v934 = vpop.f32.mrf.mxu0
        %935 = vmatprep.mubr.f32.mxu0 0.0
        %936 = vmatmul.mubr.f32.gmra.mxu0 %v734
        %v937 = vpop.f32.mrf.mxu0
        %v938 = vadd.f32 %v668, %v937
        %v939 = vpop.f32.mrf.mxu0
        %940 = vmatprep.mubr.f32.mxu0 0.0
        %941 = vmatmul.mubr.f32.gmra.mxu0 %v737
        %v942 = vpop.f32.mrf.mxu0
        %v943 = vadd.f32 %v668, %v942
        %v944 = vpop.f32.mrf.mxu0
        %945 = vmatprep.mubr.f32.mxu0 0.0
        %946 = vmatmul.mubr.f32.gmra.mxu0 %v740
        %v947 = vpop.f32.mrf.mxu0
        %v948 = vadd.f32 %v668, %v947
        %v949 = vpop.f32.mrf.mxu0
        %950 = vmatprep.mubr.f32.mxu0 0.0
        %951 = vmatmul.mubr.f32.gmra.mxu0 %v743
        %v952 = vpop.f32.mrf.mxu0
        %v953 = vadd.f32 %v668, %v952
        %v954 = vpop.f32.mrf.mxu0
        %955 = vmatprep.mubr.f32.mxu0 0.0
        %956 = vmatmul.mubr.f32.gmra.mxu0 %v746
        %v957 = vpop.f32.mrf.mxu0
        %v958 = vadd.f32 %v668, %v957
        %v959 = vpop.f32.mrf.mxu0
        %960 = vmatprep.mubr.f32.mxu0 0.0
        %961 = vmatmul.mubr.f32.gmra.mxu0 %v749
        %v962 = vpop.f32.mrf.mxu0
        %v963 = vadd.f32 %v668, %v962
        %v964 = vpop.f32.mrf.mxu0
        %965 = vmatprep.mubr.f32.mxu0 0.0
        %966 = vmatmul.mubr.f32.gmra.mxu0 %v752
        %v967 = vpop.f32.mrf.mxu0
        %v968 = vadd.f32 %v668, %v967
        %v969 = vpop.f32.mrf.mxu0
        %970 = vmatprep.mubr.f32.mxu0 0.0
        %971 = vmatmul.mubr.f32.gmra.mxu0 %v755
        %v972 = vpop.f32.mrf.mxu0
        %v973 = vadd.f32 %v668, %v972
        %v974 = vpop.f32.mrf.mxu0
        %975 = vmatprep.mubr.f32.mxu0 0.0
        %976 = vmatmul.mubr.f32.gmra.mxu0 %v758
        %v977 = vpop.f32.mrf.mxu0
        %v978 = vadd.f32 %v668, %v977
        %v979 = vpop.f32.mrf.mxu0
        %980 = vmatprep.mubr.f32.mxu0 0.0
        %981 = vmatmul.mubr.f32.gmra.mxu0 %v761
        %v982 = vpop.f32.mrf.mxu0
        %v983 = vadd.f32 %v668, %v982
        %v984 = vpop.f32.mrf.mxu0
        %985 = vmatprep.mubr.f32.mxu0 0.0
        %986 = vmatmul.mubr.f32.gmra.mxu0 %v764
        %v987 = vpop.f32.mrf.mxu0
        %v988 = vadd.f32 %v668, %v987
        %v989 = vpop.f32.mrf.mxu0
        %990 = vdwg.mxu0
        %v991 = vmax.f32 %v833, 0.0
        %v992 = vmax.f32 %v838, 0.0
        %v993 = vmax.f32 %v843, 0.0
        %v994 = vmax.f32 %v848, 0.0
        %v995 = vmax.f32 %v853, 0.0
        %v996 = vmax.f32 %v858, 0.0
        %v997 = vmax.f32 %v863, 0.0
        %v998 = vmax.f32 %v868, 0.0
        %v999 = vmax.f32 %v873, 0.0
        %v1000 = vmax.f32 %v878, 0.0
        %v1001 = vmax.f32 %v883, 0.0
        %v1002 = vmax.f32 %v888, 0.0
        %v1003 = vmax.f32 %v893, 0.0
        %v1004 = vmax.f32 %v898, 0.0
        %v1005 = vmax.f32 %v903, 0.0
        %v1006 = vmax.f32 %v908, 0.0
        %v1007 = vmax.f32 %v913, 0.0
        %v1008 = vmax.f32 %v918, 0.0
        %v1009 = vmax.f32 %v923, 0.0
        %v1010 = vmax.f32 %v928, 0.0
        %v1011 = vmax.f32 %v933, 0.0
        %v1012 = vmax.f32 %v938, 0.0
        %v1013 = vmax.f32 %v943, 0.0
        %v1014 = vmax.f32 %v948, 0.0
        %v1015 = vmax.f32 %v953, 0.0
        %v1016 = vmax.f32 %v958, 0.0
        %v1017 = vmax.f32 %v963, 0.0
        %v1018 = vmax.f32 %v968, 0.0
        %v1019 = vmax.f32 %v973, 0.0
        %v1020 = vmax.f32 %v978, 0.0
        %v1021 = vmax.f32 %v983, 0.0
        %v1022 = vmax.f32 %v988, 0.0
        %v1023 = vld [vmem:[#allocation4] sm:$0xff]
        %v1024 = vld [vmem:[#allocation4 + $0x8] sm:$0xff]
        %v1025 = vld [vmem:[#allocation4 + $0x10] sm:$0xff]
        %v1026 = vld [vmem:[#allocation4 + $0x18] sm:$0xff]
        %v1027 = vld [vmem:[#allocation4 + $0x20] sm:$0xff]
        %v1028 = vld [vmem:[#allocation4 + $0x28] sm:$0xff]
        %v1029 = vld [vmem:[#allocation4 + $0x30] sm:$0xff]
        %v1030 = vld [vmem:[#allocation4 + $0x38] sm:$0xff]
        %v1031 = vlaneseq
        %v1032 = vshrl.u32 %v1031, 7
        %v1033 = vsub.s32 0, %v1032
        %v1034 = vrot.slane %v297, %v1033
        %v1036 = vsel %vm669, %v991, 0
        %v1039 = vsel %vm669, %v992, 0
        %v1042 = vsel %vm669, %v993, 0
        %v1045 = vsel %vm669, %v994, 0
        %v1048 = vsel %vm669, %v995, 0
        %v1051 = vsel %vm669, %v996, 0
        %v1054 = vsel %vm669, %v997, 0
        %v1057 = vsel %vm669, %v998, 0
        %v1060 = vsel %vm669, %v999, 0
        %v1063 = vsel %vm669, %v1000, 0
        %v1066 = vsel %vm669, %v1001, 0
        %v1069 = vsel %vm669, %v1002, 0
        %v1072 = vsel %vm669, %v1003, 0
        %v1075 = vsel %vm669, %v1004, 0
        %v1078 = vsel %vm669, %v1005, 0
        %v1081 = vsel %vm669, %v1006, 0
        %v1084 = vsel %vm669, %v1007, 0
        %v1087 = vsel %vm669, %v1008, 0
        %v1090 = vsel %vm669, %v1009, 0
        %v1093 = vsel %vm669, %v1010, 0
        %v1096 = vsel %vm669, %v1011, 0
        %v1099 = vsel %vm669, %v1012, 0
        %v1102 = vsel %vm669, %v1013, 0
        %v1105 = vsel %vm669, %v1014, 0
        %v1108 = vsel %vm669, %v1015, 0
        %v1111 = vsel %vm669, %v1016, 0
        %v1114 = vsel %vm669, %v1017, 0
        %v1117 = vsel %vm669, %v1018, 0
        %v1120 = vsel %vm669, %v1019, 0
        %v1123 = vsel %vm669, %v1020, 0
        %v1126 = vsel %vm669, %v1021, 0
        %v1129 = vsel %vm669, %v1022, 0
        %1131 = vmatprep.subr.mxu0 0.0
        %1132 = vmatpush1.msra.mxu0 0.0
        %1133 = vmatprep.subr.mxu0 0.0
        %1134 = vmatpush1.msra.mxu0 0.0
        %1135 = vmatprep.subr.mxu0 0.0
        %1136 = vmatpush1.msra.mxu0 0.0
        %1137 = vmatprep.subr.mxu0 0.0
        %1138 = vmatpush1.msra.mxu0 0.0
        %1139 = vmatprep.subr.mxu0 0.0
        %1140 = vmatpush1.msra.mxu0 0.0
        %1141 = vmatprep.subr.mxu0 0.0
        %1142 = vmatpush1.msra.mxu0 0.0
        %1143 = vmatprep.subr.mxu0 0.0
        %1144 = vmatpush1.msra.mxu0 0.0
        %1145 = vmatprep.subr.mxu0 0.0
        %1146 = vmatpush1.msra.mxu0 0.0
        %1147 = vmatprep.subr.mxu0 0.0
        %1148 = vmatpush1.msra.mxu0 %v1030
        %1149 = vmatprep.subr.mxu0 0.0
        %1150 = vmatpush1.msra.mxu0 %v1029
        %1151 = vmatprep.subr.mxu0 0.0
        %1152 = vmatpush1.msra.mxu0 %v1028
        %1153 = vmatprep.subr.mxu0 0.0
        %1154 = vmatpush1.msra.mxu0 %v1027
        %1155 = vmatprep.subr.mxu0 0.0
        %1156 = vmatpush1.msra.mxu0 %v1026
        %1157 = vmatprep.subr.mxu0 0.0
        %1158 = vmatpush1.msra.mxu0 %v1025
        %1159 = vmatprep.subr.mxu0 0.0
        %1160 = vmatpush1.msra.mxu0 %v1024
        %1161 = vmatprep.subr.mxu0 0.0
        %1162 = vmatpush1.msra.mxu0 %v1023
        %1163 = vmatprep.subr.mxu0 0.0
        %1164 = vmatpush2.msra.mxu0 0.0
        %1165 = vmatprep.subr.mxu0 0.0
        %1166 = vmatpush2.msra.mxu0 0.0
        %1167 = vmatprep.subr.mxu0 0.0
        %1168 = vmatpush2.msra.mxu0 0.0
        %1169 = vmatprep.subr.mxu0 0.0
        %1170 = vmatpush2.msra.mxu0 0.0
        %1171 = vmatprep.subr.mxu0 0.0
        %1172 = vmatpush2.msra.mxu0 0.0
        %1173 = vmatprep.subr.mxu0 0.0
        %1174 = vmatpush2.msra.mxu0 0.0
        %1175 = vmatprep.subr.mxu0 0.0
        %1176 = vmatpush2.msra.mxu0 0.0
        %1177 = vmatprep.subr.mxu0 0.0
        %1178 = vmatpush2.msra.mxu0 0.0
        %1179 = vmatprep.subr.mxu0 0.0
        %1180 = vmatpush2.msra.mxu0 0.0
        %1181 = vmatprep.subr.mxu0 0.0
        %1182 = vmatpush2.msra.mxu0 0.0
        %1183 = vmatprep.subr.mxu0 0.0
        %1184 = vmatpush2.msra.mxu0 0.0
        %1185 = vmatprep.subr.mxu0 0.0
        %1186 = vmatpush2.msra.mxu0 0.0
        %1187 = vmatprep.subr.mxu0 0.0
        %1188 = vmatpush2.msra.mxu0 0.0
        %1189 = vmatprep.subr.mxu0 0.0
        %1190 = vmatpush2.msra.mxu0 0.0
        %1191 = vmatprep.subr.mxu0 0.0
        %1192 = vmatpush2.msra.mxu0 0.0
        %1193 = vmatprep.subr.mxu0 0.0
        %1194 = vmatpush2.msra.mxu0 0.0
        %1195 = vmatprep.mubr.f32.mxu0 0.0
        %1196 = vmatmul.mubr.f32.gmra.mxu0 %v1036
        %v1197 = vpop.f32.mrf.mxu0
        %v1198 = vadd.f32 %v1034, %v1197
        %v1199 = vpop.f32.mrf.mxu0
        %1200 = vmatprep.mubr.f32.mxu0 0.0
        %1201 = vmatmul.mubr.f32.gmra.mxu0 %v1039
        %v1202 = vpop.f32.mrf.mxu0
        %v1203 = vadd.f32 %v1034, %v1202
        %v1204 = vpop.f32.mrf.mxu0
        %1205 = vmatprep.mubr.f32.mxu0 0.0
        %1206 = vmatmul.mubr.f32.gmra.mxu0 %v1042
        %v1207 = vpop.f32.mrf.mxu0
        %v1208 = vadd.f32 %v1034, %v1207
        %v1209 = vpop.f32.mrf.mxu0
        %1210 = vmatprep.mubr.f32.mxu0 0.0
        %1211 = vmatmul.mubr.f32.gmra.mxu0 %v1045
        %v1212 = vpop.f32.mrf.mxu0
        %v1213 = vadd.f32 %v1034, %v1212
        %v1214 = vpop.f32.mrf.mxu0
        %1215 = vmatprep.mubr.f32.mxu0 0.0
        %1216 = vmatmul.mubr.f32.gmra.mxu0 %v1048
        %v1217 = vpop.f32.mrf.mxu0
        %v1218 = vadd.f32 %v1034, %v1217
        %v1219 = vpop.f32.mrf.mxu0
        %1220 = vmatprep.mubr.f32.mxu0 0.0
        %1221 = vmatmul.mubr.f32.gmra.mxu0 %v1051
        %v1222 = vpop.f32.mrf.mxu0
        %v1223 = vadd.f32 %v1034, %v1222
        %v1224 = vpop.f32.mrf.mxu0
        %1225 = vmatprep.mubr.f32.mxu0 0.0
        %1226 = vmatmul.mubr.f32.gmra.mxu0 %v1054
        %v1227 = vpop.f32.mrf.mxu0
        %v1228 = vadd.f32 %v1034, %v1227
        %v1229 = vpop.f32.mrf.mxu0
        %1230 = vmatprep.mubr.f32.mxu0 0.0
        %1231 = vmatmul.mubr.f32.gmra.mxu0 %v1057
        %v1232 = vpop.f32.mrf.mxu0
        %v1233 = vadd.f32 %v1034, %v1232
        %v1234 = vpop.f32.mrf.mxu0
        %1235 = vmatprep.mubr.f32.mxu0 0.0
        %1236 = vmatmul.mubr.f32.gmra.mxu0 %v1060
        %v1237 = vpop.f32.mrf.mxu0
        %v1238 = vadd.f32 %v1034, %v1237
        %v1239 = vpop.f32.mrf.mxu0
        %1240 = vmatprep.mubr.f32.mxu0 0.0
        %1241 = vmatmul.mubr.f32.gmra.mxu0 %v1063
        %v1242 = vpop.f32.mrf.mxu0
        %v1243 = vadd.f32 %v1034, %v1242
        %v1244 = vpop.f32.mrf.mxu0
        %1245 = vmatprep.mubr.f32.mxu0 0.0
        %1246 = vmatmul.mubr.f32.gmra.mxu0 %v1066
        %v1247 = vpop.f32.mrf.mxu0
        %v1248 = vadd.f32 %v1034, %v1247
        %v1249 = vpop.f32.mrf.mxu0
        %1250 = vmatprep.mubr.f32.mxu0 0.0
        %1251 = vmatmul.mubr.f32.gmra.mxu0 %v1069
        %v1252 = vpop.f32.mrf.mxu0
        %v1253 = vadd.f32 %v1034, %v1252
        %v1254 = vpop.f32.mrf.mxu0
        %1255 = vmatprep.mubr.f32.mxu0 0.0
        %1256 = vmatmul.mubr.f32.gmra.mxu0 %v1072
        %v1257 = vpop.f32.mrf.mxu0
        %v1258 = vadd.f32 %v1034, %v1257
        %v1259 = vpop.f32.mrf.mxu0
        %1260 = vmatprep.mubr.f32.mxu0 0.0
        %1261 = vmatmul.mubr.f32.gmra.mxu0 %v1075
        %v1262 = vpop.f32.mrf.mxu0
        %v1263 = vadd.f32 %v1034, %v1262
        %v1264 = vpop.f32.mrf.mxu0
        %1265 = vmatprep.mubr.f32.mxu0 0.0
        %1266 = vmatmul.mubr.f32.gmra.mxu0 %v1078
        %v1267 = vpop.f32.mrf.mxu0
        %v1268 = vadd.f32 %v1034, %v1267
        %v1269 = vpop.f32.mrf.mxu0
        %1270 = vmatprep.mubr.f32.mxu0 0.0
        %1271 = vmatmul.mubr.f32.gmra.mxu0 %v1081
        %v1272 = vpop.f32.mrf.mxu0
        %v1273 = vadd.f32 %v1034, %v1272
        %v1274 = vpop.f32.mrf.mxu0
        %1275 = vmatprep.mubr.f32.mxu0 0.0
        %1276 = vmatmul.mubr.f32.gmra.mxu0 %v1084
        %v1277 = vpop.f32.mrf.mxu0
        %v1278 = vadd.f32 %v1034, %v1277
        %v1279 = vpop.f32.mrf.mxu0
        %1280 = vmatprep.mubr.f32.mxu0 0.0
        %1281 = vmatmul.mubr.f32.gmra.mxu0 %v1087
        %v1282 = vpop.f32.mrf.mxu0
        %v1283 = vadd.f32 %v1034, %v1282
        %v1284 = vpop.f32.mrf.mxu0
        %1285 = vmatprep.mubr.f32.mxu0 0.0
        %1286 = vmatmul.mubr.f32.gmra.mxu0 %v1090
        %v1287 = vpop.f32.mrf.mxu0
        %v1288 = vadd.f32 %v1034, %v1287
        %v1289 = vpop.f32.mrf.mxu0
        %1290 = vmatprep.mubr.f32.mxu0 0.0
        %1291 = vmatmul.mubr.f32.gmra.mxu0 %v1093
        %v1292 = vpop.f32.mrf.mxu0
        %v1293 = vadd.f32 %v1034, %v1292
        %v1294 = vpop.f32.mrf.mxu0
        %1295 = vmatprep.mubr.f32.mxu0 0.0
        %1296 = vmatmul.mubr.f32.gmra.mxu0 %v1096
        %v1297 = vpop.f32.mrf.mxu0
        %v1298 = vadd.f32 %v1034, %v1297
        %v1299 = vpop.f32.mrf.mxu0
        %1300 = vmatprep.mubr.f32.mxu0 0.0
        %1301 = vmatmul.mubr.f32.gmra.mxu0 %v1099
        %v1302 = vpop.f32.mrf.mxu0
        %v1303 = vadd.f32 %v1034, %v1302
        %v1304 = vpop.f32.mrf.mxu0
        %1305 = vmatprep.mubr.f32.mxu0 0.0
        %1306 = vmatmul.mubr.f32.gmra.mxu0 %v1102
        %v1307 = vpop.f32.mrf.mxu0
        %v1308 = vadd.f32 %v1034, %v1307
        %v1309 = vpop.f32.mrf.mxu0
        %1310 = vmatprep.mubr.f32.mxu0 0.0
        %1311 = vmatmul.mubr.f32.gmra.mxu0 %v1105
        %v1312 = vpop.f32.mrf.mxu0
        %v1313 = vadd.f32 %v1034, %v1312
        %v1314 = vpop.f32.mrf.mxu0
        %1315 = vmatprep.mubr.f32.mxu0 0.0
        %1316 = vmatmul.mubr.f32.gmra.mxu0 %v1108
        %v1317 = vpop.f32.mrf.mxu0
        %v1318 = vadd.f32 %v1034, %v1317
        %v1319 = vpop.f32.mrf.mxu0
        %1320 = vmatprep.mubr.f32.mxu0 0.0
        %1321 = vmatmul.mubr.f32.gmra.mxu0 %v1111
        %v1322 = vpop.f32.mrf.mxu0
        %v1323 = vadd.f32 %v1034, %v1322
        %v1324 = vpop.f32.mrf.mxu0
        %1325 = vmatprep.mubr.f32.mxu0 0.0
        %1326 = vmatmul.mubr.f32.gmra.mxu0 %v1114
        %v1327 = vpop.f32.mrf.mxu0
        %v1328 = vadd.f32 %v1034, %v1327
        %v1329 = vpop.f32.mrf.mxu0
        %1330 = vmatprep.mubr.f32.mxu0 0.0
        %1331 = vmatmul.mubr.f32.gmra.mxu0 %v1117
        %v1332 = vpop.f32.mrf.mxu0
        %v1333 = vadd.f32 %v1034, %v1332
        %v1334 = vpop.f32.mrf.mxu0
        %1335 = vmatprep.mubr.f32.mxu0 0.0
        %1336 = vmatmul.mubr.f32.gmra.mxu0 %v1120
        %v1337 = vpop.f32.mrf.mxu0
        %v1338 = vadd.f32 %v1034, %v1337
        %v1339 = vpop.f32.mrf.mxu0
        %1340 = vmatprep.mubr.f32.mxu0 0.0
        %1341 = vmatmul.mubr.f32.gmra.mxu0 %v1123
        %v1342 = vpop.f32.mrf.mxu0
        %v1343 = vadd.f32 %v1034, %v1342
        %v1344 = vpop.f32.mrf.mxu0
        %1345 = vmatprep.mubr.f32.mxu0 0.0
        %1346 = vmatmul.mubr.f32.gmra.mxu0 %v1126
        %v1347 = vpop.f32.mrf.mxu0
        %v1348 = vadd.f32 %v1034, %v1347
        %v1349 = vpop.f32.mrf.mxu0
        %1350 = vmatprep.mubr.f32.mxu0 0.0
        %1351 = vmatmul.mubr.f32.gmra.mxu0 %v1129
        %v1352 = vpop.f32.mrf.mxu0
        %v1353 = vadd.f32 %v1034, %v1352
        %v1354 = vpop.f32.mrf.mxu0
        %1355 = vdwg.mxu0
        %v1356 = vsel %vm669, %v1198, 0.0
        %1357 = vadd.xlane.f32.xlu0 %v1356
        %v1358 = vpop.xlane.xlu0 %1357
        %v1359 = vsel %vm669, %v1203, 0.0
        %1360 = vadd.xlane.f32.xlu0 %v1359
        %v1361 = vpop.xlane.xlu0 %1360
        %v1362 = vsel %vm669, %v1208, 0.0
        %1363 = vadd.xlane.f32.xlu0 %v1362
        %v1364 = vpop.xlane.xlu0 %1363
        %v1365 = vsel %vm669, %v1213, 0.0
        %1366 = vadd.xlane.f32.xlu0 %v1365
        %v1367 = vpop.xlane.xlu0 %1366
        %v1368 = vsel %vm669, %v1218, 0.0
        %1369 = vadd.xlane.f32.xlu0 %v1368
        %v1370 = vpop.xlane.xlu0 %1369
        %v1371 = vsel %vm669, %v1223, 0.0
        %1372 = vadd.xlane.f32.xlu0 %v1371
        %v1373 = vpop.xlane.xlu0 %1372
        %v1374 = vsel %vm669, %v1228, 0.0
        %1375 = vadd.xlane.f32.xlu0 %v1374
        %v1376 = vpop.xlane.xlu0 %1375
        %v1377 = vsel %vm669, %v1233, 0.0
        %1378 = vadd.xlane.f32.xlu0 %v1377
        %v1379 = vpop.xlane.xlu0 %1378
        %v1380 = vsel %vm669, %v1238, 0.0
        %1381 = vadd.xlane.f32.xlu0 %v1380
        %v1382 = vpop.xlane.xlu0 %1381
        %v1383 = vsel %vm669, %v1243, 0.0
        %1384 = vadd.xlane.f32.xlu0 %v1383
        %v1385 = vpop.xlane.xlu0 %1384
        %v1386 = vsel %vm669, %v1248, 0.0
        %1387 = vadd.xlane.f32.xlu0 %v1386
        %v1388 = vpop.xlane.xlu0 %1387
        %v1389 = vsel %vm669, %v1253, 0.0
        %1390 = vadd.xlane.f32.xlu0 %v1389
        %v1391 = vpop.xlane.xlu0 %1390
        %v1392 = vsel %vm669, %v1258, 0.0
        %1393 = vadd.xlane.f32.xlu0 %v1392
        %v1394 = vpop.xlane.xlu0 %1393
        %v1395 = vsel %vm669, %v1263, 0.0
        %1396 = vadd.xlane.f32.xlu0 %v1395
        %v1397 = vpop.xlane.xlu0 %1396
        %v1398 = vsel %vm669, %v1268, 0.0
        %1399 = vadd.xlane.f32.xlu0 %v1398
        %v1400 = vpop.xlane.xlu0 %1399
        %v1401 = vsel %vm669, %v1273, 0.0
        %1402 = vadd.xlane.f32.xlu0 %v1401
        %v1403 = vpop.xlane.xlu0 %1402
        %v1404 = vsel %vm669, %v1278, 0.0
        %1405 = vadd.xlane.f32.xlu0 %v1404
        %v1406 = vpop.xlane.xlu0 %1405
        %v1407 = vsel %vm669, %v1283, 0.0
        %1408 = vadd.xlane.f32.xlu0 %v1407
        %v1409 = vpop.xlane.xlu0 %1408
        %v1410 = vsel %vm669, %v1288, 0.0
        %1411 = vadd.xlane.f32.xlu0 %v1410
        %v1412 = vpop.xlane.xlu0 %1411
        %v1413 = vsel %vm669, %v1293, 0.0
        %1414 = vadd.xlane.f32.xlu0 %v1413
        %v1415 = vpop.xlane.xlu0 %1414
        %v1416 = vsel %vm669, %v1298, 0.0
        %1417 = vadd.xlane.f32.xlu0 %v1416
        %v1418 = vpop.xlane.xlu0 %1417
        %v1419 = vsel %vm669, %v1303, 0.0
        %1420 = vadd.xlane.f32.xlu0 %v1419
        %v1421 = vpop.xlane.xlu0 %1420
        %v1422 = vsel %vm669, %v1308, 0.0
        %1423 = vadd.xlane.f32.xlu0 %v1422
        %v1424 = vpop.xlane.xlu0 %1423
        %v1425 = vsel %vm669, %v1313, 0.0
        %1426 = vadd.xlane.f32.xlu0 %v1425
        %v1427 = vpop.xlane.xlu0 %1426
        %v1428 = vsel %vm669, %v1318, 0.0
        %1429 = vadd.xlane.f32.xlu0 %v1428
        %v1430 = vpop.xlane.xlu0 %1429
        %v1431 = vsel %vm669, %v1323, 0.0
        %1432 = vadd.xlane.f32.xlu0 %v1431
        %v1433 = vpop.xlane.xlu0 %1432
        %v1434 = vsel %vm669, %v1328, 0.0
        %1435 = vadd.xlane.f32.xlu0 %v1434
        %v1436 = vpop.xlane.xlu0 %1435
        %v1437 = vsel %vm669, %v1333, 0.0
        %1438 = vadd.xlane.f32.xlu0 %v1437
        %v1439 = vpop.xlane.xlu0 %1438
        %v1440 = vsel %vm669, %v1338, 0.0
        %1441 = vadd.xlane.f32.xlu0 %v1440
        %v1442 = vpop.xlane.xlu0 %1441
        %v1443 = vsel %vm669, %v1343, 0.0
        %1444 = vadd.xlane.f32.xlu0 %v1443
        %v1445 = vpop.xlane.xlu0 %1444
        %v1446 = vsel %vm669, %v1348, 0.0
        %1447 = vadd.xlane.f32.xlu0 %v1446
        %v1448 = vpop.xlane.xlu0 %1447
        %v1449 = vsel %vm669, %v1353, 0.0
        %1450 = vadd.xlane.f32.xlu0 %v1449
        %v1451 = vpop.xlane.xlu0 %1450
        %v1452 = vrcp.pop 64.0
        %v1453 = vmul.f32 %v1358, %v1452
        %v1454 = vmul.f32 %v1361, %v1452
        %v1455 = vmul.f32 %v1364, %v1452
        %v1456 = vmul.f32 %v1367, %v1452
        %v1457 = vmul.f32 %v1370, %v1452
        %v1458 = vmul.f32 %v1373, %v1452
        %v1459 = vmul.f32 %v1376, %v1452
        %v1460 = vmul.f32 %v1379, %v1452
        %v1461 = vmul.f32 %v1382, %v1452
        %v1462 = vmul.f32 %v1385, %v1452
        %v1463 = vmul.f32 %v1388, %v1452
        %v1464 = vmul.f32 %v1391, %v1452
        %v1465 = vmul.f32 %v1394, %v1452
        %v1466 = vmul.f32 %v1397, %v1452
        %v1467 = vmul.f32 %v1400, %v1452
        %v1468 = vmul.f32 %v1403, %v1452
        %v1469 = vmul.f32 %v1406, %v1452
        %v1470 = vmul.f32 %v1409, %v1452
        %v1471 = vmul.f32 %v1412, %v1452
        %v1472 = vmul.f32 %v1415, %v1452
        %v1473 = vmul.f32 %v1418, %v1452
        %v1474 = vmul.f32 %v1421, %v1452
        %v1475 = vmul.f32 %v1424, %v1452
        %v1476 = vmul.f32 %v1427, %v1452
        %v1477 = vmul.f32 %v1430, %v1452
        %v1478 = vmul.f32 %v1433, %v1452
        %v1479 = vmul.f32 %v1436, %v1452
        %v1480 = vmul.f32 %v1439, %v1452
        %v1481 = vmul.f32 %v1442, %v1452
        %v1482 = vmul.f32 %v1445, %v1452
        %v1483 = vmul.f32 %v1448, %v1452
        %v1484 = vmul.f32 %v1451, %v1452
        %v1485 = vsub.f32 %v1198, %v1453
        %v1486 = vsub.f32 %v1203, %v1454
        %v1487 = vsub.f32 %v1208, %v1455
        %v1488 = vsub.f32 %v1213, %v1456
        %v1489 = vsub.f32 %v1218, %v1457
        %v1490 = vsub.f32 %v1223, %v1458
        %v1491 = vsub.f32 %v1228, %v1459
        %v1492 = vsub.f32 %v1233, %v1460
        %v1493 = vsub.f32 %v1238, %v1461
        %v1494 = vsub.f32 %v1243, %v1462
        %v1495 = vsub.f32 %v1248, %v1463
        %v1496 = vsub.f32 %v1253, %v1464
        %v1497 = vsub.f32 %v1258, %v1465
        %v1498 = vsub.f32 %v1263, %v1466
        %v1499 = vsub.f32 %v1268, %v1467
        %v1500 = vsub.f32 %v1273, %v1468
        %v1501 = vsub.f32 %v1278, %v1469
        %v1502 = vsub.f32 %v1283, %v1470
        %v1503 = vsub.f32 %v1288, %v1471
        %v1504 = vsub.f32 %v1293, %v1472
        %v1505 = vsub.f32 %v1298, %v1473
        %v1506 = vsub.f32 %v1303, %v1474
        %v1507 = vsub.f32 %v1308, %v1475
        %v1508 = vsub.f32 %v1313, %v1476
        %v1509 = vsub.f32 %v1318, %v1477
        %v1510 = vsub.f32 %v1323, %v1478
        %v1511 = vsub.f32 %v1328, %v1479
        %v1512 = vsub.f32 %v1333, %v1480
        %v1513 = vsub.f32 %v1338, %v1481
        %v1514 = vsub.f32 %v1343, %v1482
        %v1515 = vsub.f32 %v1348, %v1483
        %v1516 = vsub.f32 %v1353, %v1484
        %v1517 = vmul.f32 %v1485, %v1485
        %v1518 = vmul.f32 %v1486, %v1486
        %v1519 = vmul.f32 %v1487, %v1487
        %v1520 = vmul.f32 %v1488, %v1488
        %v1521 = vmul.f32 %v1489, %v1489
        %v1522 = vmul.f32 %v1490, %v1490
        %v1523 = vmul.f32 %v1491, %v1491
        %v1524 = vmul.f32 %v1492, %v1492
        %v1525 = vmul.f32 %v1493, %v1493
        %v1526 = vmul.f32 %v1494, %v1494
        %v1527 = vmul.f32 %v1495, %v1495
        %v1528 = vmul.f32 %v1496, %v1496
        %v1529 = vmul.f32 %v1497, %v1497
        %v1530 = vmul.f32 %v1498, %v1498
        %v1531 = vmul.f32 %v1499, %v1499
        %v1532 = vmul.f32 %v1500, %v1500
        %v1533 = vmul.f32 %v1501, %v1501
        %v1534 = vmul.f32 %v1502, %v1502
        %v1535 = vmul.f32 %v1503, %v1503
        %v1536 = vmul.f32 %v1504, %v1504
        %v1537 = vmul.f32 %v1505, %v1505
        %v1538 = vmul.f32 %v1506, %v1506
        %v1539 = vmul.f32 %v1507, %v1507
        %v1540 = vmul.f32 %v1508, %v1508
        %v1541 = vmul.f32 %v1509, %v1509
        %v1542 = vmul.f32 %v1510, %v1510
        %v1543 = vmul.f32 %v1511, %v1511
        %v1544 = vmul.f32 %v1512, %v1512
        %v1545 = vmul.f32 %v1513, %v1513
        %v1546 = vmul.f32 %v1514, %v1514
        %v1547 = vmul.f32 %v1515, %v1515
        %v1548 = vmul.f32 %v1516, %v1516
        %v1549 = vsel %vm669, %v1517, 0.0
        %1550 = vadd.xlane.f32.xlu0 %v1549
        %v1551 = vpop.xlane.xlu0 %1550
        %v1552 = vsel %vm669, %v1518, 0.0
        %1553 = vadd.xlane.f32.xlu0 %v1552
        %v1554 = vpop.xlane.xlu0 %1553
        %v1555 = vsel %vm669, %v1519, 0.0
        %1556 = vadd.xlane.f32.xlu0 %v1555
        %v1557 = vpop.xlane.xlu0 %1556
        %v1558 = vsel %vm669, %v1520, 0.0
        %1559 = vadd.xlane.f32.xlu0 %v1558
        %v1560 = vpop.xlane.xlu0 %1559
        %v1561 = vsel %vm669, %v1521, 0.0
        %1562 = vadd.xlane.f32.xlu0 %v1561
        %v1563 = vpop.xlane.xlu0 %1562
        %v1564 = vsel %vm669, %v1522, 0.0
        %1565 = vadd.xlane.f32.xlu0 %v1564
        %v1566 = vpop.xlane.xlu0 %1565
        %v1567 = vsel %vm669, %v1523, 0.0
        %1568 = vadd.xlane.f32.xlu0 %v1567
        %v1569 = vpop.xlane.xlu0 %1568
        %v1570 = vsel %vm669, %v1524, 0.0
        %1571 = vadd.xlane.f32.xlu0 %v1570
        %v1572 = vpop.xlane.xlu0 %1571
        %v1573 = vsel %vm669, %v1525, 0.0
        %1574 = vadd.xlane.f32.xlu0 %v1573
        %v1575 = vpop.xlane.xlu0 %1574
        %v1576 = vsel %vm669, %v1526, 0.0
        %1577 = vadd.xlane.f32.xlu0 %v1576
        %v1578 = vpop.xlane.xlu0 %1577
        %v1579 = vsel %vm669, %v1527, 0.0
        %1580 = vadd.xlane.f32.xlu0 %v1579
        %v1581 = vpop.xlane.xlu0 %1580
        %v1582 = vsel %vm669, %v1528, 0.0
        %1583 = vadd.xlane.f32.xlu0 %v1582
        %v1584 = vpop.xlane.xlu0 %1583
        %v1585 = vsel %vm669, %v1529, 0.0
        %1586 = vadd.xlane.f32.xlu0 %v1585
        %v1587 = vpop.xlane.xlu0 %1586
        %v1588 = vsel %vm669, %v1530, 0.0
        %1589 = vadd.xlane.f32.xlu0 %v1588
        %v1590 = vpop.xlane.xlu0 %1589
        %v1591 = vsel %vm669, %v1531, 0.0
        %1592 = vadd.xlane.f32.xlu0 %v1591
        %v1593 = vpop.xlane.xlu0 %1592
        %v1594 = vsel %vm669, %v1532, 0.0
        %1595 = vadd.xlane.f32.xlu0 %v1594
        %v1596 = vpop.xlane.xlu0 %1595
        %v1597 = vsel %vm669, %v1533, 0.0
        %1598 = vadd.xlane.f32.xlu0 %v1597
        %v1599 = vpop.xlane.xlu0 %1598
        %v1600 = vsel %vm669, %v1534, 0.0
        %1601 = vadd.xlane.f32.xlu0 %v1600
        %v1602 = vpop.xlane.xlu0 %1601
        %v1603 = vsel %vm669, %v1535, 0.0
        %1604 = vadd.xlane.f32.xlu0 %v1603
        %v1605 = vpop.xlane.xlu0 %1604
        %v1606 = vsel %vm669, %v1536, 0.0
        %1607 = vadd.xlane.f32.xlu0 %v1606
        %v1608 = vpop.xlane.xlu0 %1607
        %v1609 = vsel %vm669, %v1537, 0.0
        %1610 = vadd.xlane.f32.xlu0 %v1609
        %v1611 = vpop.xlane.xlu0 %1610
        %v1612 = vsel %vm669, %v1538, 0.0
        %1613 = vadd.xlane.f32.xlu0 %v1612
        %v1614 = vpop.xlane.xlu0 %1613
        %v1615 = vsel %vm669, %v1539, 0.0
        %1616 = vadd.xlane.f32.xlu0 %v1615
        %v1617 = vpop.xlane.xlu0 %1616
        %v1618 = vsel %vm669, %v1540, 0.0
        %1619 = vadd.xlane.f32.xlu0 %v1618
        %v1620 = vpop.xlane.xlu0 %1619
        %v1621 = vsel %vm669, %v1541, 0.0
        %1622 = vadd.xlane.f32.xlu0 %v1621
        %v1623 = vpop.xlane.xlu0 %1622
        %v1624 = vsel %vm669, %v1542, 0.0
        %1625 = vadd.xlane.f32.xlu0 %v1624
        %v1626 = vpop.xlane.xlu0 %1625
        %v1627 = vsel %vm669, %v1543, 0.0
        %1628 = vadd.xlane.f32.xlu0 %v1627
        %v1629 = vpop.xlane.xlu0 %1628
        %v1630 = vsel %vm669, %v1544, 0.0
        %1631 = vadd.xlane.f32.xlu0 %v1630
        %v1632 = vpop.xlane.xlu0 %1631
        %v1633 = vsel %vm669, %v1545, 0.0
        %1634 = vadd.xlane.f32.xlu0 %v1633
        %v1635 = vpop.xlane.xlu0 %1634
        %v1636 = vsel %vm669, %v1546, 0.0
        %1637 = vadd.xlane.f32.xlu0 %v1636
        %v1638 = vpop.xlane.xlu0 %1637
        %v1639 = vsel %vm669, %v1547, 0.0
        %1640 = vadd.xlane.f32.xlu0 %v1639
        %v1641 = vpop.xlane.xlu0 %1640
        %v1642 = vsel %vm669, %v1548, 0.0
        %1643 = vadd.xlane.f32.xlu0 %v1642
        %v1644 = vpop.xlane.xlu0 %1643
        %v1645 = vmul.f32 %v1551, %v1452
        %v1646 = vmul.f32 %v1554, %v1452
        %v1647 = vmul.f32 %v1557, %v1452
        %v1648 = vmul.f32 %v1560, %v1452
        %v1649 = vmul.f32 %v1563, %v1452
        %v1650 = vmul.f32 %v1566, %v1452
        %v1651 = vmul.f32 %v1569, %v1452
        %v1652 = vmul.f32 %v1572, %v1452
        %v1653 = vmul.f32 %v1575, %v1452
        %v1654 = vmul.f32 %v1578, %v1452
        %v1655 = vmul.f32 %v1581, %v1452
        %v1656 = vmul.f32 %v1584, %v1452
        %v1657 = vmul.f32 %v1587, %v1452
        %v1658 = vmul.f32 %v1590, %v1452
        %v1659 = vmul.f32 %v1593, %v1452
        %v1660 = vmul.f32 %v1596, %v1452
        %v1661 = vmul.f32 %v1599, %v1452
        %v1662 = vmul.f32 %v1602, %v1452
        %v1663 = vmul.f32 %v1605, %v1452
        %v1664 = vmul.f32 %v1608, %v1452
        %v1665 = vmul.f32 %v1611, %v1452
        %v1666 = vmul.f32 %v1614, %v1452
        %v1667 = vmul.f32 %v1617, %v1452
        %v1668 = vmul.f32 %v1620, %v1452
        %v1669 = vmul.f32 %v1623, %v1452
        %v1670 = vmul.f32 %v1626, %v1452
        %v1671 = vmul.f32 %v1629, %v1452
        %v1672 = vmul.f32 %v1632, %v1452
        %v1673 = vmul.f32 %v1635, %v1452
        %v1674 = vmul.f32 %v1638, %v1452
        %v1675 = vmul.f32 %v1641, %v1452
        %v1676 = vmul.f32 %v1644, %v1452
        %v1677 = vadd.f32 %v1645, 1e-05
        %v1678 = vadd.f32 %v1646, 1e-05
        %v1679 = vadd.f32 %v1647, 1e-05
        %v1680 = vadd.f32 %v1648, 1e-05
        %v1681 = vadd.f32 %v1649, 1e-05
        %v1682 = vadd.f32 %v1650, 1e-05
        %v1683 = vadd.f32 %v1651, 1e-05
        %v1684 = vadd.f32 %v1652, 1e-05
        %v1685 = vadd.f32 %v1653, 1e-05
        %v1686 = vadd.f32 %v1654, 1e-05
        %v1687 = vadd.f32 %v1655, 1e-05
        %v1688 = vadd.f32 %v1656, 1e-05
        %v1689 = vadd.f32 %v1657, 1e-05
        %v1690 = vadd.f32 %v1658, 1e-05
        %v1691 = vadd.f32 %v1659, 1e-05
        %v1692 = vadd.f32 %v1660, 1e-05
        %v1693 = vadd.f32 %v1661, 1e-05
        %v1694 = vadd.f32 %v1662, 1e-05
        %v1695 = vadd.f32 %v1663, 1e-05
        %v1696 = vadd.f32 %v1664, 1e-05
        %v1697 = vadd.f32 %v1665, 1e-05
        %v1698 = vadd.f32 %v1666, 1e-05
        %v1699 = vadd.f32 %v1667, 1e-05
        %v1700 = vadd.f32 %v1668, 1e-05
        %v1701 = vadd.f32 %v1669, 1e-05
        %v1702 = vadd.f32 %v1670, 1e-05
        %v1703 = vadd.f32 %v1671, 1e-05
        %v1704 = vadd.f32 %v1672, 1e-05
        %v1705 = vadd.f32 %v1673, 1e-05
        %v1706 = vadd.f32 %v1674, 1e-05
        %v1707 = vadd.f32 %v1675, 1e-05
        %v1708 = vadd.f32 %v1676, 1e-05
        %v1709 = vrsqrt.pop %v1677
        %v1710 = vrsqrt.pop %v1678
        %v1711 = vrsqrt.pop %v1679
        %v1712 = vrsqrt.pop %v1680
        %v1713 = vrsqrt.pop %v1681
        %v1714 = vrsqrt.pop %v1682
        %v1715 = vrsqrt.pop %v1683
        %v1716 = vrsqrt.pop %v1684
        %v1717 = vrsqrt.pop %v1685
        %v1718 = vrsqrt.pop %v1686
        %v1719 = vrsqrt.pop %v1687
        %v1720 = vrsqrt.pop %v1688
        %v1721 = vrsqrt.pop %v1689
        %v1722 = vrsqrt.pop %v1690
        %v1723 = vrsqrt.pop %v1691
        %v1724 = vrsqrt.pop %v1692
        %v1725 = vrsqrt.pop %v1693
        %v1726 = vrsqrt.pop %v1694
        %v1727 = vrsqrt.pop %v1695
        %v1728 = vrsqrt.pop %v1696
        %v1729 = vrsqrt.pop %v1697
        %v1730 = vrsqrt.pop %v1698
        %v1731 = vrsqrt.pop %v1699
        %v1732 = vrsqrt.pop %v1700
        %v1733 = vrsqrt.pop %v1701
        %v1734 = vrsqrt.pop %v1702
        %v1735 = vrsqrt.pop %v1703
        %v1736 = vrsqrt.pop %v1704
        %v1737 = vrsqrt.pop %v1705
        %v1738 = vrsqrt.pop %v1706
        %v1739 = vrsqrt.pop %v1707
        %v1740 = vrsqrt.pop %v1708
        %v1741 = vmul.f32 %v1485, %v1709
        %v1742 = vmul.f32 %v1486, %v1710
        %v1743 = vmul.f32 %v1487, %v1711
        %v1744 = vmul.f32 %v1488, %v1712
        %v1745 = vmul.f32 %v1489, %v1713
        %v1746 = vmul.f32 %v1490, %v1714
        %v1747 = vmul.f32 %v1491, %v1715
        %v1748 = vmul.f32 %v1492, %v1716
        %v1749 = vmul.f32 %v1493, %v1717
        %v1750 = vmul.f32 %v1494, %v1718
        %v1751 = vmul.f32 %v1495, %v1719
        %v1752 = vmul.f32 %v1496, %v1720
        %v1753 = vmul.f32 %v1497, %v1721
        %v1754 = vmul.f32 %v1498, %v1722
        %v1755 = vmul.f32 %v1499, %v1723
        %v1756 = vmul.f32 %v1500, %v1724
        %v1757 = vmul.f32 %v1501, %v1725
        %v1758 = vmul.f32 %v1502, %v1726
        %v1759 = vmul.f32 %v1503, %v1727
        %v1760 = vmul.f32 %v1504, %v1728
        %v1761 = vmul.f32 %v1505, %v1729
        %v1762 = vmul.f32 %v1506, %v1730
        %v1763 = vmul.f32 %v1507, %v1731
        %v1764 = vmul.f32 %v1508, %v1732
        %v1765 = vmul.f32 %v1509, %v1733
        %v1766 = vmul.f32 %v1510, %v1734
        %v1767 = vmul.f32 %v1511, %v1735
        %v1768 = vmul.f32 %v1512, %v1736
        %v1769 = vmul.f32 %v1513, %v1737
        %v1770 = vmul.f32 %v1514, %v1738
        %v1771 = vmul.f32 %v1515, %v1739
        %v1772 = vmul.f32 %v1516, %v1740
        %v1773 = vlaneseq
        %v1774 = vshrl.u32 %v1773, 7
        %v1775 = vsub.s32 0, %v1774
        %v1776 = vrot.slane %v298, %v1775
        %v1777 = vmul.f32 %v1741, %v1776
        %v1778 = vmul.f32 %v1742, %v1776
        %v1779 = vmul.f32 %v1743, %v1776
        %v1780 = vmul.f32 %v1744, %v1776
        %v1781 = vmul.f32 %v1745, %v1776
        %v1782 = vmul.f32 %v1746, %v1776
        %v1783 = vmul.f32 %v1747, %v1776
        %v1784 = vmul.f32 %v1748, %v1776
        %v1785 = vmul.f32 %v1749, %v1776
        %v1786 = vmul.f32 %v1750, %v1776
        %v1787 = vmul.f32 %v1751, %v1776
        %v1788 = vmul.f32 %v1752, %v1776
        %v1789 = vmul.f32 %v1753, %v1776
        %v1790 = vmul.f32 %v1754, %v1776
        %v1791 = vmul.f32 %v1755, %v1776
        %v1792 = vmul.f32 %v1756, %v1776
        %v1793 = vmul.f32 %v1757, %v1776
        %v1794 = vmul.f32 %v1758, %v1776
        %v1795 = vmul.f32 %v1759, %v1776
        %v1796 = vmul.f32 %v1760, %v1776
        %v1797 = vmul.f32 %v1761, %v1776
        %v1798 = vmul.f32 %v1762, %v1776
        %v1799 = vmul.f32 %v1763, %v1776
        %v1800 = vmul.f32 %v1764, %v1776
        %v1801 = vmul.f32 %v1765, %v1776
        %v1802 = vmul.f32 %v1766, %v1776
        %v1803 = vmul.f32 %v1767, %v1776
        %v1804 = vmul.f32 %v1768, %v1776
        %v1805 = vmul.f32 %v1769, %v1776
        %v1806 = vmul.f32 %v1770, %v1776
        %v1807 = vmul.f32 %v1771, %v1776
        %v1808 = vmul.f32 %v1772, %v1776
        %v1809 = vlaneseq
        %v1810 = vshrl.u32 %v1809, 7
        %v1811 = vsub.s32 0, %v1810
        %v1812 = vrot.slane %v299, %v1811
        %v1813 = vadd.f32 %v1777, %v1812
        %v1814 = vadd.f32 %v1778, %v1812
        %v1815 = vadd.f32 %v1779, %v1812
        %v1816 = vadd.f32 %v1780, %v1812
        %v1817 = vadd.f32 %v1781, %v1812
        %v1818 = vadd.f32 %v1782, %v1812
        %v1819 = vadd.f32 %v1783, %v1812
        %v1820 = vadd.f32 %v1784, %v1812
        %v1821 = vadd.f32 %v1785, %v1812
        %v1822 = vadd.f32 %v1786, %v1812
        %v1823 = vadd.f32 %v1787, %v1812
        %v1824 = vadd.f32 %v1788, %v1812
        %v1825 = vadd.f32 %v1789, %v1812
        %v1826 = vadd.f32 %v1790, %v1812
        %v1827 = vadd.f32 %v1791, %v1812
        %v1828 = vadd.f32 %v1792, %v1812
        %v1829 = vadd.f32 %v1793, %v1812
        %v1830 = vadd.f32 %v1794, %v1812
        %v1831 = vadd.f32 %v1795, %v1812
        %v1832 = vadd.f32 %v1796, %v1812
        %v1833 = vadd.f32 %v1797, %v1812
        %v1834 = vadd.f32 %v1798, %v1812
        %v1835 = vadd.f32 %v1799, %v1812
        %v1836 = vadd.f32 %v1800, %v1812
        %v1837 = vadd.f32 %v1801, %v1812
        %v1838 = vadd.f32 %v1802, %v1812
        %v1839 = vadd.f32 %v1803, %v1812
        %v1840 = vadd.f32 %v1804, %v1812
        %v1841 = vadd.f32 %v1805, %v1812
        %v1842 = vadd.f32 %v1806, %v1812
        %v1843 = vadd.f32 %v1807, %v1812
        %v1844 = vadd.f32 %v1808, %v1812
        %v1845 = vunpack.c.l.bf16 %v263
        %v1846 = vunpack.c.l.bf16 %v264
        %v1847 = vunpack.c.l.bf16 %v265
        %v1848 = vunpack.c.l.bf16 %v266
        %v1849 = vunpack.c.l.bf16 %v267
        %v1850 = vunpack.c.l.bf16 %v268
        %v1851 = vunpack.c.l.bf16 %v269
        %v1852 = vunpack.c.l.bf16 %v270
        %v1853 = vunpack.c.l.bf16 %v271
        %v1854 = vunpack.c.l.bf16 %v272
        %v1855 = vunpack.c.l.bf16 %v273
        %v1856 = vunpack.c.l.bf16 %v274
        %v1857 = vunpack.c.l.bf16 %v275
        %v1858 = vunpack.c.l.bf16 %v276
        %v1859 = vunpack.c.l.bf16 %v277
        %v1860 = vunpack.c.l.bf16 %v278
        %v1861 = vunpack.c.l.bf16 %v279
        %v1862 = vunpack.c.l.bf16 %v280
        %v1863 = vunpack.c.l.bf16 %v281
        %v1864 = vunpack.c.l.bf16 %v282
        %v1865 = vunpack.c.l.bf16 %v283
        %v1866 = vunpack.c.l.bf16 %v284
        %v1867 = vunpack.c.l.bf16 %v285
        %v1868 = vunpack.c.l.bf16 %v286
        %v1869 = vunpack.c.l.bf16 %v287
        %v1870 = vunpack.c.l.bf16 %v288
        %v1871 = vunpack.c.l.bf16 %v289
        %v1872 = vunpack.c.l.bf16 %v290
        %v1873 = vunpack.c.l.bf16 %v291
        %v1874 = vunpack.c.l.bf16 %v292
        %v1875 = vunpack.c.l.bf16 %v293
        %v1876 = vunpack.c.l.bf16 %v294
        %1878 = vset.pattern.permute.xlu0 0
        %1879 = vperm.xlu0 %1878, %v1845
        %v1880 = vpop.permute.xlu0 %1879
        %1883 = vset.pattern.permute.xlu0 0
        %1884 = vperm.xlu0 %1883, %v1846
        %v1885 = vpop.permute.xlu0 %1884
        %1888 = vset.pattern.permute.xlu0 0
        %1889 = vperm.xlu0 %1888, %v1847
        %v1890 = vpop.permute.xlu0 %1889
        %1893 = vset.pattern.permute.xlu0 0
        %1894 = vperm.xlu0 %1893, %v1848
        %v1895 = vpop.permute.xlu0 %1894
        %1898 = vset.pattern.permute.xlu0 0
        %1899 = vperm.xlu0 %1898, %v1849
        %v1900 = vpop.permute.xlu0 %1899
        %1903 = vset.pattern.permute.xlu0 0
        %1904 = vperm.xlu0 %1903, %v1850
        %v1905 = vpop.permute.xlu0 %1904
        %1908 = vset.pattern.permute.xlu0 0
        %1909 = vperm.xlu0 %1908, %v1851
        %v1910 = vpop.permute.xlu0 %1909
        %1913 = vset.pattern.permute.xlu0 0
        %1914 = vperm.xlu0 %1913, %v1852
        %v1915 = vpop.permute.xlu0 %1914
        %1918 = vset.pattern.permute.xlu0 0
        %1919 = vperm.xlu0 %1918, %v1853
        %v1920 = vpop.permute.xlu0 %1919
        %1923 = vset.pattern.permute.xlu0 0
        %1924 = vperm.xlu0 %1923, %v1854
        %v1925 = vpop.permute.xlu0 %1924
        %1928 = vset.pattern.permute.xlu0 0
        %1929 = vperm.xlu0 %1928, %v1855
        %v1930 = vpop.permute.xlu0 %1929
        %1933 = vset.pattern.permute.xlu0 0
        %1934 = vperm.xlu0 %1933, %v1856
        %v1935 = vpop.permute.xlu0 %1934
        %1938 = vset.pattern.permute.xlu0 0
        %1939 = vperm.xlu0 %1938, %v1857
        %v1940 = vpop.permute.xlu0 %1939
        %1943 = vset.pattern.permute.xlu0 0
        %1944 = vperm.xlu0 %1943, %v1858
        %v1945 = vpop.permute.xlu0 %1944
        %1948 = vset.pattern.permute.xlu0 0
        %1949 = vperm.xlu0 %1948, %v1859
        %v1950 = vpop.permute.xlu0 %1949
        %1953 = vset.pattern.permute.xlu0 0
        %1954 = vperm.xlu0 %1953, %v1860
        %v1955 = vpop.permute.xlu0 %1954
        %1958 = vset.pattern.permute.xlu0 0
        %1959 = vperm.xlu0 %1958, %v1861
        %v1960 = vpop.permute.xlu0 %1959
        %1963 = vset.pattern.permute.xlu0 0
        %1964 = vperm.xlu0 %1963, %v1862
        %v1965 = vpop.permute.xlu0 %1964
        %1968 = vset.pattern.permute.xlu0 0
        %1969 = vperm.xlu0 %1968, %v1863
        %v1970 = vpop.permute.xlu0 %1969
        %1973 = vset.pattern.permute.xlu0 0
        %1974 = vperm.xlu0 %1973, %v1864
        %v1975 = vpop.permute.xlu0 %1974
        %1978 = vset.pattern.permute.xlu0 0
        %1979 = vperm.xlu0 %1978, %v1865
        %v1980 = vpop.permute.xlu0 %1979
        %1983 = vset.pattern.permute.xlu0 0
        %1984 = vperm.xlu0 %1983, %v1866
        %v1985 = vpop.permute.xlu0 %1984
        %1988 = vset.pattern.permute.xlu0 0
        %1989 = vperm.xlu0 %1988, %v1867
        %v1990 = vpop.permute.xlu0 %1989
        %1993 = vset.pattern.permute.xlu0 0
        %1994 = vperm.xlu0 %1993, %v1868
        %v1995 = vpop.permute.xlu0 %1994
        %1998 = vset.pattern.permute.xlu0 0
        %1999 = vperm.xlu0 %1998, %v1869
        %v2000 = vpop.permute.xlu0 %1999
        %2003 = vset.pattern.permute.xlu0 0
        %2004 = vperm.xlu0 %2003, %v1870
        %v2005 = vpop.permute.xlu0 %2004
        %2008 = vset.pattern.permute.xlu0 0
        %2009 = vperm.xlu0 %2008, %v1871
        %v2010 = vpop.permute.xlu0 %2009
        %2013 = vset.pattern.permute.xlu0 0
        %2014 = vperm.xlu0 %2013, %v1872
        %v2015 = vpop.permute.xlu0 %2014
        %2018 = vset.pattern.permute.xlu0 0
        %2019 = vperm.xlu0 %2018, %v1873
        %v2020 = vpop.permute.xlu0 %2019
        %2023 = vset.pattern.permute.xlu0 0
        %2024 = vperm.xlu0 %2023, %v1874
        %v2025 = vpop.permute.xlu0 %2024
        %2028 = vset.pattern.permute.xlu0 0
        %2029 = vperm.xlu0 %2028, %v1875
        %v2030 = vpop.permute.xlu0 %2029
        %2033 = vset.pattern.permute.xlu0 0
        %2034 = vperm.xlu0 %2033, %v1876
        %v2035 = vpop.permute.xlu0 %2034
        %v2037 = vmul.f32 %v1813, %v1880
        %v2038 = vmul.f32 %v1814, %v1885
        %v2039 = vmul.f32 %v1815, %v1890
        %v2040 = vmul.f32 %v1816, %v1895
        %v2041 = vmul.f32 %v1817, %v1900
        %v2042 = vmul.f32 %v1818, %v1905
        %v2043 = vmul.f32 %v1819, %v1910
        %v2044 = vmul.f32 %v1820, %v1915
        %v2045 = vmul.f32 %v1821, %v1920
        %v2046 = vmul.f32 %v1822, %v1925
        %v2047 = vmul.f32 %v1823, %v1930
        %v2048 = vmul.f32 %v1824, %v1935
        %v2049 = vmul.f32 %v1825, %v1940
        %v2050 = vmul.f32 %v1826, %v1945
        %v2051 = vmul.f32 %v1827, %v1950
        %v2052 = vmul.f32 %v1828, %v1955
        %v2053 = vmul.f32 %v1829, %v1960
        %v2054 = vmul.f32 %v1830, %v1965
        %v2055 = vmul.f32 %v1831, %v1970
        %v2056 = vmul.f32 %v1832, %v1975
        %v2057 = vmul.f32 %v1833, %v1980
        %v2058 = vmul.f32 %v1834, %v1985
        %v2059 = vmul.f32 %v1835, %v1990
        %v2060 = vmul.f32 %v1836, %v1995
        %v2061 = vmul.f32 %v1837, %v2000
        %v2062 = vmul.f32 %v1838, %v2005
        %v2063 = vmul.f32 %v1839, %v2010
        %v2064 = vmul.f32 %v1840, %v2015
        %v2065 = vmul.f32 %v1841, %v2020
        %v2066 = vmul.f32 %v1842, %v2025
        %v2067 = vmul.f32 %v1843, %v2030
        %v2068 = vmul.f32 %v1844, %v2035
        %2069 = vst.msk [vmem:[%s260] sm:$0xff] %vm669, %v2037
        %2070 = vst.msk [vmem:[%s260 + $0x8] sm:$0xff] %vm669, %v2038
        %2071 = vst.msk [vmem:[%s260 + $0x10] sm:$0xff] %vm669, %v2039
        %2072 = vst.msk [vmem:[%s260 + $0x18] sm:$0xff] %vm669, %v2040
        %2073 = vst.msk [vmem:[%s260 + $0x20] sm:$0xff] %vm669, %v2041
        %2074 = vst.msk [vmem:[%s260 + $0x28] sm:$0xff] %vm669, %v2042
        %2075 = vst.msk [vmem:[%s260 + $0x30] sm:$0xff] %vm669, %v2043
        %2076 = vst.msk [vmem:[%s260 + $0x38] sm:$0xff] %vm669, %v2044
        %2077 = vst.msk [vmem:[%s260 + $0x40] sm:$0xff] %vm669, %v2045
        %2078 = vst.msk [vmem:[%s260 + $0x48] sm:$0xff] %vm669, %v2046
        %2079 = vst.msk [vmem:[%s260 + $0x50] sm:$0xff] %vm669, %v2047
        %2080 = vst.msk [vmem:[%s260 + $0x58] sm:$0xff] %vm669, %v2048
        %2081 = vst.msk [vmem:[%s260 + $0x60] sm:$0xff] %vm669, %v2049
        %2082 = vst.msk [vmem:[%s260 + $0x68] sm:$0xff] %vm669, %v2050
        %2083 = vst.msk [vmem:[%s260 + $0x70] sm:$0xff] %vm669, %v2051
        %2084 = vst.msk [vmem:[%s260 + $0x78] sm:$0xff] %vm669, %v2052
        %2085 = vst.msk [vmem:[%s260 + $0x80] sm:$0xff] %vm669, %v2053
        %2086 = vst.msk [vmem:[%s260 + $0x88] sm:$0xff] %vm669, %v2054
        %2087 = vst.msk [vmem:[%s260 + $0x90] sm:$0xff] %vm669, %v2055
        %2088 = vst.msk [vmem:[%s260 + $0x98] sm:$0xff] %vm669, %v2056
        %2089 = vst.msk [vmem:[%s260 + $0xa0] sm:$0xff] %vm669, %v2057
        %2090 = vst.msk [vmem:[%s260 + $0xa8] sm:$0xff] %vm669, %v2058
        %2091 = vst.msk [vmem:[%s260 + $0xb0] sm:$0xff] %vm669, %v2059
        %2092 = vst.msk [vmem:[%s260 + $0xb8] sm:$0xff] %vm669, %v2060
        %2093 = vst.msk [vmem:[%s260 + $0xc0] sm:$0xff] %vm669, %v2061
        %2094 = vst.msk [vmem:[%s260 + $0xc8] sm:$0xff] %vm669, %v2062
        %2095 = vst.msk [vmem:[%s260 + $0xd0] sm:$0xff] %vm669, %v2063
        %2096 = vst.msk [vmem:[%s260 + $0xd8] sm:$0xff] %vm669, %v2064
        %2097 = vst.msk [vmem:[%s260 + $0xe0] sm:$0xff] %vm669, %v2065
        %2098 = vst.msk [vmem:[%s260 + $0xe8] sm:$0xff] %vm669, %v2066
        %2099 = vst.msk [vmem:[%s260 + $0xf0] sm:$0xff] %vm669, %v2067
        %2100 = vst.msk [vmem:[%s260 + $0xf8] sm:$0xff] %vm669, %v2068
        %s2101 = smul.u32 32, %s20
        %p2102 = scmp.lt.s32.totalorder %s2101, 63
        %s2103 = scalar_select %p2102, %s2101, 63
        %s2104 = smul.addr %s2103, 8
        %s2105 = scalar_lea.vmem %s5, %s2104
        // Predicated region
        $region49: #{tpu_custom_call.1} parent=39 // pred_check
          %p2106 = pneg %p148
        $region50: #{tpu_custom_call.1} parent=39 // pred_check_branch
          %2108 = sbr.rel (%p2106) target = $region52
        $region51: #{tpu_custom_call.1} parent=39 // pred_region
          %s2109 = smul.u32 32, %s20
        $region52: #{tpu_custom_call.1} parent=39 // pred_fallthru
          _
      $region40: #{tpu_custom_call.1} parent=5 // pred_fallthru
        _
      %p2110 = scmp.le.s32.totalorder 2, %s15
      // Predicated region
      $region53: #{tpu_custom_call.1} parent=5 // pred_check
        %p2111 = pneg %p2110
      $region54: #{tpu_custom_call.1} parent=5 // pred_check_branch
        %2113 = sbr.rel (%p2111) target = $region56
      $region55: #{tpu_custom_call.1} parent=5 // pred_region
        %s2114 = ssub.s32 %s15, 2
        // Predicated region
        $region57: #{tpu_custom_call.1} parent=55 // pred_check
          %p2115 = pneg %p154
        $region58: #{tpu_custom_call.1} parent=55 // pred_check_branch
          %2117 = sbr.rel (%p2115) target = $region60
        $region59: #{tpu_custom_call.1} parent=55 // pred_region
          %s2118 = smul.u32 32, %s21
          %p2119 = scmp.lt.s32.totalorder %s2118, 63
          %s2120 = scalar_select %p2119, %s2118, 63
          %s2121 = smul.addr %s2120, 8
          %s2122 = scalar_lea.vmem %s5, %s2121
        $region60: #{tpu_custom_call.1} parent=55 // pred_fallthru
          _
      $region56: #{tpu_custom_call.1} parent=5 // pred_fallthru
        _
    $region6: #{tpu_custom_call.1} parent=1 // loop_footer
      %s19 = sadd.s32 1, %s15
    $region7: #{tpu_custom_call.1} parent=1 // loop_footer_branch
      %14 = sbr.rel target = $region3
    $region8: #{tpu_custom_call.1} parent=1 // loop_exit
      _
    %2123 = vsyncpa [#allocation3], 1
    %s2124 = scalar_lea.sflag [#allocation3], 1
    %2125 = vsyncpa %s2124, 1
    %2126 = vsyncpa [#allocation5], 1

</llo_original>
